<compile_context>
chip_gen: v5e
topology: v5e:2x2
jax: 0.10.0
libtpu: 0.0.40
codegen_flags: <defaults>
</compile_context>

<pallas_src>
import functools

import jax
import jax.numpy as jnp
from jax.experimental import pallas as pl
from jax.experimental.pallas import tpu as pltpu

LANE = 128


# ---------------------------------- the kernel ------------------------------------
def _bnn_sample_forward_kernel(
    x_ref,                      # (B, K)                -- grid-invariant
    mu_w1_ref, sig_w1_ref,      # (K, H)                -- grid-invariant
    mu_b1_ref, sig_b1_ref,      # (1, H)                -- grid-invariant
    mu_w2_ref, sig_w2_ref,      # (H, A_pad)            -- grid-invariant
    mu_b2_ref, sig_b2_ref,      # (1, A_pad)            -- grid-invariant
    eps_w1_ref,                 # (SPG, K, H)           -- per grid step
    eps_b1_ref,                 # (SPG, 1, H)
    eps_w2_ref,                 # (SPG, H, A_pad)
    eps_b2_ref,                 # (SPG, 1, A_pad)
    o_ref,                      # (SPG, B, A_pad)
    *, samples_per_step,
):
    # Shared (sample-independent) operands, loaded once per grid step.
    x = x_ref[...].astype(jnp.bfloat16)
    mu_w1, sig_w1 = mu_w1_ref[...], sig_w1_ref[...]
    mu_b1, sig_b1 = mu_b1_ref[...], sig_b1_ref[...]
    mu_w2, sig_w2 = mu_w2_ref[...], sig_w2_ref[...]
    mu_b2, sig_b2 = mu_b2_ref[...], sig_b2_ref[...]

    # Short unrolled loop over the samples packed into this grid step: independent pipelines
    # (VPU weight-combine, MXU matmuls, f32 epilogue) the scheduler can interleave.
    for i in range(samples_per_step):
        # Reparameterized posterior sample: W = mu + sigma * eps   (f32 combine on the VPU).
        w1 = mu_w1 + sig_w1 * eps_w1_ref[i]
        b1 = mu_b1 + sig_b1 * eps_b1_ref[i]
        w2 = mu_w2 + sig_w2 * eps_w2_ref[i]
        b2 = mu_b2 + sig_b2 * eps_b2_ref[i]

        # Fused 2-layer MLP: bf16 into the MXU, f32 accumulation, f32 bias+ReLU epilogue.
        h = jnp.dot(x, w1.astype(jnp.bfloat16), preferred_element_type=jnp.float32)
        h = jnp.maximum(h + b1, 0.0)
        o = jnp.dot(h.astype(jnp.bfloat16), w2.astype(jnp.bfloat16),
                    preferred_element_type=jnp.float32)
        o_ref[i] = (o + b2).astype(o_ref.dtype)          # lane-dense (A_pad = 128) store


# ---------------------------------- the wrapper ------------------------------------
@functools.partial(jax.jit, static_argnames=("num_actions",))
def bnn_thompson_forward(x, params, eps, *, num_actions):
    """Evaluate S posterior samples (sample-weights + forward) in ONE pallas_call.

    `eps` holds pre-drawn standard normals (one set per posterior sample); sigma = softplus(rho)
    is computed here once so the kernel does zero transcendental work.
    """
    mu_w1, rho_w1 = params["mu_w1"], params["rho_w1"]
    mu_b1, rho_b1 = params["mu_b1"], params["rho_b1"]
    mu_w2, rho_w2 = params["mu_w2"], params["rho_w2"]
    mu_b2, rho_b2 = params["mu_b2"], params["rho_b2"]

    # Numerically stable softplus, hoisted out of the kernel (shared by every sample).
    sig_w1 = jax.nn.softplus(rho_w1)
    sig_b1 = jax.nn.softplus(rho_b1)
    sig_w2 = jax.nn.softplus(rho_w2)
    sig_b2 = jax.nn.softplus(rho_b2)

    batch, context_dim = x.shape
    hidden = mu_w1.shape[1]
    a_pad = mu_w2.shape[1]
    n_samples = eps["w1"].shape[0]

    # Pack several posterior samples per grid step (amortize per-step overhead); keep the grid
    # extent >= 2 / a multiple of 2 where possible so the sample axis shards across v7x's 2 TCs.
    spg = 1
    for cand in (4, 2, 1):
        if n_samples % cand == 0:
            spg = cand
            break
    grid = (n_samples // spg,)

    def invariant(shape):
        # Whole-array block, same block for every grid step (weights / x are shared).
        return pl.BlockSpec(shape, lambda s: (0,) * len(shape))

    def per_sample(shape):
        # Leading dim indexed by the grid step (spg samples per step).
        return pl.BlockSpec(shape, lambda s: (s,) + (0,) * (len(shape) - 1))

    # Advisory cost: MXU matmuls + VPU weight-combine; no transcendentals left in the kernel.
    flops_per_sample = (2 * batch * context_dim * hidden          # layer-1 matmul
                        + 2 * batch * hidden * a_pad              # layer-2 matmul
                        + 2 * (context_dim * hidden + hidden * a_pad + hidden + a_pad)  # combine
                        + 2 * batch * hidden + batch * a_pad)     # bias + relu epilogue
    param_elems = sum(int(p.size) for p in (mu_w1, sig_w1, mu_b1, sig_b1,
                                            mu_w2, sig_w2, mu_b2, sig_b2))
    eps_elems = sum(int(e.size) for e in eps.values())
    bytes_accessed = 4 * (int(x.size) + param_elems + eps_elems + n_samples * batch * a_pad)

    out = pl.pallas_call(
        functools.partial(_bnn_sample_forward_kernel, samples_per_step=spg),
        out_shape=jax.ShapeDtypeStruct((n_samples, batch, a_pad), jnp.float32),
        grid_spec=pltpu.PrefetchScalarGridSpec(
            num_scalar_prefetch=0,
            grid=grid,
            in_specs=[
                invariant((batch, context_dim)),
                invariant((context_dim, hidden)), invariant((context_dim, hidden)),
                invariant((1, hidden)), invariant((1, hidden)),
                invariant((hidden, a_pad)), invariant((hidden, a_pad)),
                invariant((1, a_pad)), invariant((1, a_pad)),
                per_sample((spg, context_dim, hidden)),
                per_sample((spg, 1, hidden)),
                per_sample((spg, hidden, a_pad)),
                per_sample((spg, 1, a_pad)),
            ],
            out_specs=pl.BlockSpec((spg, batch, a_pad),
                                   lambda s: (s, 0, 0)),
        ),
        compiler_params=pltpu.CompilerParams(
            dimension_semantics=("parallel",),   # sample axis is independent -> megacore shard
        ),
        cost_estimate=pl.CostEstimate(
            flops=n_samples * flops_per_sample,
            transcendentals=0,
            bytes_accessed=bytes_accessed,
        ),
    )(x,
      mu_w1, sig_w1, mu_b1, sig_b1,
      mu_w2, sig_w2, mu_b2, sig_b2,
      eps["w1"], eps["b1"], eps["w2"], eps["b2"])

    return out[:, :, :num_actions]


# --------------------------- variational parameter / eps setup ---------------------------
def make_variational_params(key, context_dim, hidden_dim, num_actions,
                            rho_init=-3.0, lane=LANE):
    """(mu, rho) for a 2-layer Bayesian MLP, action dim zero-padded to a lane multiple.

    Padded rho columns are very negative so their softplus-sigma is ~0; the padded output
    columns are discarded by the wrapper.  (Keep this invariant if editing the padding.)
    """
    a_pad = ((num_actions + lane - 1) // lane) * lane
    k1, k2 = jax.random.split(key)

    mu_w1 = 0.1 * jax.random.normal(k1, (context_dim, hidden_dim), jnp.float32)
    mu_w2_raw = 0.1 * jax.random.normal(k2, (hidden_dim, num_actions), jnp.float32)
    mu_w2 = jnp.zeros((hidden_dim, a_pad), jnp.float32).at[:, :num_actions].set(mu_w2_raw)

    neg = jnp.float32(-20.0)  # softplus(-20) ~ 2e-9 -> effectively deterministic padding
    rho_w1 = jnp.full((context_dim, hidden_dim), rho_init, jnp.float32)
    rho_w2 = jnp.full((hidden_dim, a_pad), neg, jnp.float32).at[:, :num_actions].set(rho_init)

    mu_b1 = jnp.zeros((1, hidden_dim), jnp.float32)
    mu_b2 = jnp.zeros((1, a_pad), jnp.float32)
    rho_b1 = jnp.full((1, hidden_dim), rho_init, jnp.float32)
    rho_b2 = jnp.full((1, a_pad), neg, jnp.float32).at[:, :num_actions].set(rho_init)

    return dict(mu_w1=mu_w1, rho_w1=rho_w1, mu_b1=mu_b1, rho_b1=rho_b1,
                mu_w2=mu_w2, rho_w2=rho_w2, mu_b2=mu_b2, rho_b2=rho_b2)


def sample_eps(key, n_samples, context_dim, hidden_dim, a_pad):
    """Standard-normal reparameterization noise, one independent set per posterior sample."""
    k1, k2, k3, k4 = jax.random.split(key, 4)
    return dict(
        w1=jax.random.normal(k1, (n_samples, context_dim, hidden_dim), jnp.float32),
        b1=jax.random.normal(k2, (n_samples, 1, hidden_dim), jnp.float32),
        w2=jax.random.normal(k3, (n_samples, hidden_dim, a_pad), jnp.float32),
        b2=jax.random.normal(k4, (n_samples, 1, a_pad), jnp.float32),
    )


def reference_sampled_forward(x, params, eps, num_actions):
    """Pure-JAX reference using the kernel's bf16-MXU / f32-acc recipe and the same eps."""
    sig_w1 = jax.nn.softplus(params["rho_w1"])
    sig_b1 = jax.nn.softplus(params["rho_b1"])
    sig_w2 = jax.nn.softplus(params["rho_w2"])
    sig_b2 = jax.nn.softplus(params["rho_b2"])
    outs = []
    for s in range(eps["w1"].shape[0]):
        w1 = params["mu_w1"] + sig_w1 * eps["w1"][s]
        b1 = params["mu_b1"] + sig_b1 * eps["b1"][s]
        w2 = params["mu_w2"] + sig_w2 * eps["w2"][s]
        b2 = params["mu_b2"] + sig_b2 * eps["b2"][s]
        h = jnp.dot(x.astype(jnp.bfloat16), w1.astype(jnp.bfloat16),
                    preferred_element_type=jnp.float32)
        h = jnp.maximum(h + b1, 0.0)
        o = jnp.dot(h.astype(jnp.bfloat16), w2.astype(jnp.bfloat16),
                    preferred_element_type=jnp.float32) + b2
        outs.append(o)
    return jnp.stack(outs, axis=0)[:, :, :num_actions]


if __name__ == "__main__":
    batch, context_dim, hidden_dim, num_actions = 16, 32, 128, 8
    n_samples = 8

    key = jax.random.PRNGKey(0)
    k_x, k_p, k_eps = jax.random.split(key, 3)
    x = jax.random.normal(k_x, (batch, context_dim), jnp.float32)

    params = make_variational_params(k_p, context_dim, hidden_dim, num_actions, rho_init=-3.0)
    a_pad = params["mu_w2"].shape[1]
    eps = sample_eps(k_eps, n_samples, context_dim, hidden_dim, a_pad)

    # --- correctness: fused sample+forward kernel must match the pure-JAX reference ---
    out = jax.block_until_ready(
        bnn_thompson_forward(x, params, eps, num_actions=num_actions))
    ref = reference_sampled_forward(x, params, eps, num_actions)

    assert out.shape == (n_samples, batch, num_actions)
    err = float(jnp.max(jnp.abs(out - ref)))
    assert jnp.allclose(out, ref, atol=2e-2, rtol=2e-2), err
    assert bool(jnp.all(jnp.isfinite(out)))
    # Different posterior draws -> per-sample outputs differ (Thompson-sampling signal present).
    assert float(jnp.std(out, axis=0).mean()) > 1e-4

    print("KERNEL_OK")
</pallas_src>

<mosaic_0001>
module attributes {stable_mosaic.version = 11 : i64} {
  func.func @_bnn_sample_forward_kernel(%arg0: i32, %arg1: memref<16x32xf32, #tpu.memory_space<vmem>>, %arg2: memref<32x128xf32, #tpu.memory_space<vmem>>, %arg3: memref<32x128xf32, #tpu.memory_space<vmem>>, %arg4: memref<1x128xf32, #tpu.memory_space<vmem>>, %arg5: memref<1x128xf32, #tpu.memory_space<vmem>>, %arg6: memref<128x128xf32, #tpu.memory_space<vmem>>, %arg7: memref<128x128xf32, #tpu.memory_space<vmem>>, %arg8: memref<1x128xf32, #tpu.memory_space<vmem>>, %arg9: memref<1x128xf32, #tpu.memory_space<vmem>>, %arg10: memref<4x32x128xf32, #tpu.memory_space<vmem>>, %arg11: memref<4x1x128xf32, #tpu.memory_space<vmem>>, %arg12: memref<4x128x128xf32, #tpu.memory_space<vmem>>, %arg13: memref<4x1x128xf32, #tpu.memory_space<vmem>>, %arg14: memref<4x16x128xf32, #tpu.memory_space<vmem>>) attributes {dimension_semantics = [#tpu.dimension_semantics<parallel>], iteration_bounds = array<i64: 2>, scalar_prefetch = 0 : i64, scratch_operands = 0 : i64, tpu.core_type = #tpu.core_type<tc>, window_params = [{pipeline_mode = #tpu.pipeline_mode<synchronous>, transform_indices = @transform_0, window_bounds = array<i64: 16, 32>}, {pipeline_mode = #tpu.pipeline_mode<synchronous>, transform_indices = @transform_1, window_bounds = array<i64: 32, 128>}, {pipeline_mode = #tpu.pipeline_mode<synchronous>, transform_indices = @transform_2, window_bounds = array<i64: 32, 128>}, {pipeline_mode = #tpu.pipeline_mode<synchronous>, transform_indices = @transform_3, window_bounds = array<i64: 1, 128>}, {pipeline_mode = #tpu.pipeline_mode<synchronous>, transform_indices = @transform_4, window_bounds = array<i64: 1, 128>}, {pipeline_mode = #tpu.pipeline_mode<synchronous>, transform_indices = @transform_5, window_bounds = array<i64: 128, 128>}, {pipeline_mode = #tpu.pipeline_mode<synchronous>, transform_indices = @transform_6, window_bounds = array<i64: 128, 128>}, {pipeline_mode = #tpu.pipeline_mode<synchronous>, transform_indices = @transform_7, window_bounds = array<i64: 1, 128>}, {pipeline_mode = #tpu.pipeline_mode<synchronous>, transform_indices = @transform_8, window_bounds = array<i64: 1, 128>}, {transform_indices = @transform_9, window_bounds = array<i64: 4, 32, 128>}, {transform_indices = @transform_10, window_bounds = array<i64: 4, 1, 128>}, {transform_indices = @transform_11, window_bounds = array<i64: 4, 128, 128>}, {transform_indices = @transform_12, window_bounds = array<i64: 4, 1, 128>}, {transform_indices = @transform_13, window_bounds = array<i64: 4, 16, 128>}]} {
    %c0 = arith.constant 0 : index
    %c0_0 = arith.constant 0 : index
    %0 = vector.load %arg1[%c0, %c0_0] : memref<16x32xf32, #tpu.memory_space<vmem>>, vector<16x32xf32>
    %1 = arith.truncf %0 : vector<16x32xf32> to vector<16x32xbf16>
    %c0_1 = arith.constant 0 : index
    %c0_2 = arith.constant 0 : index
    %2 = vector.load %arg2[%c0_1, %c0_2] : memref<32x128xf32, #tpu.memory_space<vmem>>, vector<32x128xf32>
    %c0_3 = arith.constant 0 : index
    %c0_4 = arith.constant 0 : index
    %3 = vector.load %arg3[%c0_3, %c0_4] : memref<32x128xf32, #tpu.memory_space<vmem>>, vector<32x128xf32>
    %c0_5 = arith.constant 0 : index
    %c0_6 = arith.constant 0 : index
    %4 = vector.load %arg4[%c0_5, %c0_6] : memref<1x128xf32, #tpu.memory_space<vmem>>, vector<1x128xf32>
    %c0_7 = arith.constant 0 : index
    %c0_8 = arith.constant 0 : index
    %5 = vector.load %arg5[%c0_7, %c0_8] : memref<1x128xf32, #tpu.memory_space<vmem>>, vector<1x128xf32>
    %c0_9 = arith.constant 0 : index
    %c0_10 = arith.constant 0 : index
    %6 = vector.load %arg6[%c0_9, %c0_10] : memref<128x128xf32, #tpu.memory_space<vmem>>, vector<128x128xf32>
    %c0_11 = arith.constant 0 : index
    %c0_12 = arith.constant 0 : index
    %7 = vector.load %arg7[%c0_11, %c0_12] : memref<128x128xf32, #tpu.memory_space<vmem>>, vector<128x128xf32>
    %c0_13 = arith.constant 0 : index
    %c0_14 = arith.constant 0 : index
    %8 = vector.load %arg8[%c0_13, %c0_14] : memref<1x128xf32, #tpu.memory_space<vmem>>, vector<1x128xf32>
    %c0_15 = arith.constant 0 : index
    %c0_16 = arith.constant 0 : index
    %9 = vector.load %arg9[%c0_15, %c0_16] : memref<1x128xf32, #tpu.memory_space<vmem>>, vector<1x128xf32>
    %c0_17 = arith.constant 0 : index
    %c0_18 = arith.constant 0 : index
    %c0_19 = arith.constant 0 : index
    %10 = vector.load %arg10[%c0_17, %c0_18, %c0_19] : memref<4x32x128xf32, #tpu.memory_space<vmem>>, vector<1x32x128xf32>
    %11 = vector.shape_cast %10 : vector<1x32x128xf32> to vector<32x128xf32>
    %12 = arith.mulf %3, %11 : vector<32x128xf32>
    %13 = arith.addf %2, %12 : vector<32x128xf32>
    %c0_20 = arith.constant 0 : index
    %c0_21 = arith.constant 0 : index
    %c0_22 = arith.constant 0 : index
    %14 = vector.load %arg11[%c0_20, %c0_21, %c0_22] : memref<4x1x128xf32, #tpu.memory_space<vmem>>, vector<1x1x128xf32>
    %15 = vector.shape_cast %14 : vector<1x1x128xf32> to vector<1x128xf32>
    %16 = arith.mulf %5, %15 : vector<1x128xf32>
    %17 = arith.addf %4, %16 : vector<1x128xf32>
    %c0_23 = arith.constant 0 : index
    %c0_24 = arith.constant 0 : index
    %c0_25 = arith.constant 0 : index
    %18 = vector.load %arg12[%c0_23, %c0_24, %c0_25] : memref<4x128x128xf32, #tpu.memory_space<vmem>>, vector<1x128x128xf32>
    %19 = vector.shape_cast %18 : vector<1x128x128xf32> to vector<128x128xf32>
    %20 = arith.mulf %7, %19 : vector<128x128xf32>
    %21 = arith.addf %6, %20 : vector<128x128xf32>
    %c0_26 = arith.constant 0 : index
    %c0_27 = arith.constant 0 : index
    %c0_28 = arith.constant 0 : index
    %22 = vector.load %arg13[%c0_26, %c0_27, %c0_28] : memref<4x1x128xf32, #tpu.memory_space<vmem>>, vector<1x1x128xf32>
    %23 = vector.shape_cast %22 : vector<1x1x128xf32> to vector<1x128xf32>
    %24 = arith.mulf %9, %23 : vector<1x128xf32>
    %25 = arith.addf %8, %24 : vector<1x128xf32>
    %26 = arith.truncf %13 : vector<32x128xf32> to vector<32x128xbf16>
    %cst = arith.constant dense<0.000000e+00> : vector<16x128xf32>
    %27 = tpu.matmul %1, %26, %cst {dimension_numbers = #tpu.dot_dimension_numbers<[1], [0], [0], [1], [0, 0, 1, 1], [], []>} : vector<16x32xbf16>, vector<32x128xbf16>, vector<16x128xf32> -> vector<16x128xf32>
    %28 = vector.broadcast %17 : vector<1x128xf32> to vector<16x128xf32>
    %29 = arith.addf %27, %28 : vector<16x128xf32>
    %cst_29 = arith.constant 0.000000e+00 : f32
    %30 = vector.broadcast %cst_29 : f32 to vector<16x128xf32>
    %31 = arith.maximumf %29, %30 : vector<16x128xf32>
    %32 = arith.truncf %31 : vector<16x128xf32> to vector<16x128xbf16>
    %33 = arith.truncf %21 : vector<128x128xf32> to vector<128x128xbf16>
    %cst_30 = arith.constant dense<0.000000e+00> : vector<16x128xf32>
    %34 = tpu.matmul %32, %33, %cst_30 {dimension_numbers = #tpu.dot_dimension_numbers<[1], [0], [0], [1], [0, 0, 1, 1], [], []>} : vector<16x128xbf16>, vector<128x128xbf16>, vector<16x128xf32> -> vector<16x128xf32>
    %35 = vector.broadcast %25 : vector<1x128xf32> to vector<16x128xf32>
    %36 = arith.addf %34, %35 : vector<16x128xf32>
    %c0_31 = arith.constant 0 : index
    %c0_32 = arith.constant 0 : index
    %c0_33 = arith.constant 0 : index
    %37 = vector.load %arg14[%c0_31, %c0_32, %c0_33] : memref<4x16x128xf32, #tpu.memory_space<vmem>>, vector<1x16x128xf32>
    %38 = vector.shape_cast %37 : vector<1x16x128xf32> to vector<16x128xf32>
    %39 = vector.shape_cast %36 : vector<16x128xf32> to vector<1x16x128xf32>
    tpu.vector_store %arg14[%c0_31, %c0_32, %c0_33], %39 {strides = array<i32>} : memref<4x16x128xf32, #tpu.memory_space<vmem>>, vector<1x16x128xf32>,
    %c1 = arith.constant 1 : index
    %c0_34 = arith.constant 0 : index
    %c0_35 = arith.constant 0 : index
    %40 = vector.load %arg10[%c1, %c0_34, %c0_35] : memref<4x32x128xf32, #tpu.memory_space<vmem>>, vector<1x32x128xf32>
    %41 = vector.shape_cast %40 : vector<1x32x128xf32> to vector<32x128xf32>
    %42 = arith.mulf %3, %41 : vector<32x128xf32>
    %43 = arith.addf %2, %42 : vector<32x128xf32>
    %c1_36 = arith.constant 1 : index
    %c0_37 = arith.constant 0 : index
    %c0_38 = arith.constant 0 : index
    %44 = vector.load %arg11[%c1_36, %c0_37, %c0_38] : memref<4x1x128xf32, #tpu.memory_space<vmem>>, vector<1x1x128xf32>
    %45 = vector.shape_cast %44 : vector<1x1x128xf32> to vector<1x128xf32>
    %46 = arith.mulf %5, %45 : vector<1x128xf32>
    %47 = arith.addf %4, %46 : vector<1x128xf32>
    %c1_39 = arith.constant 1 : index
    %c0_40 = arith.constant 0 : index
    %c0_41 = arith.constant 0 : index
    %48 = vector.load %arg12[%c1_39, %c0_40, %c0_41] : memref<4x128x128xf32, #tpu.memory_space<vmem>>, vector<1x128x128xf32>
    %49 = vector.shape_cast %48 : vector<1x128x128xf32> to vector<128x128xf32>
    %50 = arith.mulf %7, %49 : vector<128x128xf32>
    %51 = arith.addf %6, %50 : vector<128x128xf32>
    %c1_42 = arith.constant 1 : index
    %c0_43 = arith.constant 0 : index
    %c0_44 = arith.constant 0 : index
    %52 = vector.load %arg13[%c1_42, %c0_43, %c0_44] : memref<4x1x128xf32, #tpu.memory_space<vmem>>, vector<1x1x128xf32>
    %53 = vector.shape_cast %52 : vector<1x1x128xf32> to vector<1x128xf32>
    %54 = arith.mulf %9, %53 : vector<1x128xf32>
    %55 = arith.addf %8, %54 : vector<1x128xf32>
    %56 = arith.truncf %43 : vector<32x128xf32> to vector<32x128xbf16>
    %cst_45 = arith.constant dense<0.000000e+00> : vector<16x128xf32>
    %57 = tpu.matmul %1, %56, %cst_45 {dimension_numbers = #tpu.dot_dimension_numbers<[1], [0], [0], [1], [0, 0, 1, 1], [], []>} : vector<16x32xbf16>, vector<32x128xbf16>, vector<16x128xf32> -> vector<16x128xf32>
    %58 = vector.broadcast %47 : vector<1x128xf32> to vector<16x128xf32>
    %59 = arith.addf %57, %58 : vector<16x128xf32>
    %cst_46 = arith.constant 0.000000e+00 : f32
    %60 = vector.broadcast %cst_46 : f32 to vector<16x128xf32>
    %61 = arith.maximumf %59, %60 : vector<16x128xf32>
    %62 = arith.truncf %61 : vector<16x128xf32> to vector<16x128xbf16>
    %63 = arith.truncf %51 : vector<128x128xf32> to vector<128x128xbf16>
    %cst_47 = arith.constant dense<0.000000e+00> : vector<16x128xf32>
    %64 = tpu.matmul %62, %63, %cst_47 {dimension_numbers = #tpu.dot_dimension_numbers<[1], [0], [0], [1], [0, 0, 1, 1], [], []>} : vector<16x128xbf16>, vector<128x128xbf16>, vector<16x128xf32> -> vector<16x128xf32>
    %65 = vector.broadcast %55 : vector<1x128xf32> to vector<16x128xf32>
    %66 = arith.addf %64, %65 : vector<16x128xf32>
    %c1_48 = arith.constant 1 : index
    %c0_49 = arith.constant 0 : index
    %c0_50 = arith.constant 0 : index
    %67 = vector.load %arg14[%c1_48, %c0_49, %c0_50] : memref<4x16x128xf32, #tpu.memory_space<vmem>>, vector<1x16x128xf32>
    %68 = vector.shape_cast %67 : vector<1x16x128xf32> to vector<16x128xf32>
    %69 = vector.shape_cast %66 : vector<16x128xf32> to vector<1x16x128xf32>
    tpu.vector_store %arg14[%c1_48, %c0_49, %c0_50], %69 {strides = array<i32>} : memref<4x16x128xf32, #tpu.memory_space<vmem>>, vector<1x16x128xf32>,
    %c2 = arith.constant 2 : index
    %c0_51 = arith.constant 0 : index
    %c0_52 = arith.constant 0 : index
    %70 = vector.load %arg10[%c2, %c0_51, %c0_52] : memref<4x32x128xf32, #tpu.memory_space<vmem>>, vector<1x32x128xf32>
    %71 = vector.shape_cast %70 : vector<1x32x128xf32> to vector<32x128xf32>
    %72 = arith.mulf %3, %71 : vector<32x128xf32>
    %73 = arith.addf %2, %72 : vector<32x128xf32>
    %c2_53 = arith.constant 2 : index
    %c0_54 = arith.constant 0 : index
    %c0_55 = arith.constant 0 : index
    %74 = vector.load %arg11[%c2_53, %c0_54, %c0_55] : memref<4x1x128xf32, #tpu.memory_space<vmem>>, vector<1x1x128xf32>
    %75 = vector.shape_cast %74 : vector<1x1x128xf32> to vector<1x128xf32>
    %76 = arith.mulf %5, %75 : vector<1x128xf32>
    %77 = arith.addf %4, %76 : vector<1x128xf32>
    %c2_56 = arith.constant 2 : index
    %c0_57 = arith.constant 0 : index
    %c0_58 = arith.constant 0 : index
    %78 = vector.load %arg12[%c2_56, %c0_57, %c0_58] : memref<4x128x128xf32, #tpu.memory_space<vmem>>, vector<1x128x128xf32>
    %79 = vector.shape_cast %78 : vector<1x128x128xf32> to vector<128x128xf32>
    %80 = arith.mulf %7, %79 : vector<128x128xf32>
    %81 = arith.addf %6, %80 : vector<128x128xf32>
    %c2_59 = arith.constant 2 : index
    %c0_60 = arith.constant 0 : index
    %c0_61 = arith.constant 0 : index
    %82 = vector.load %arg13[%c2_59, %c0_60, %c0_61] : memref<4x1x128xf32, #tpu.memory_space<vmem>>, vector<1x1x128xf32>
    %83 = vector.shape_cast %82 : vector<1x1x128xf32> to vector<1x128xf32>
    %84 = arith.mulf %9, %83 : vector<1x128xf32>
    %85 = arith.addf %8, %84 : vector<1x128xf32>
    %86 = arith.truncf %73 : vector<32x128xf32> to vector<32x128xbf16>
    %cst_62 = arith.constant dense<0.000000e+00> : vector<16x128xf32>
    %87 = tpu.matmul %1, %86, %cst_62 {dimension_numbers = #tpu.dot_dimension_numbers<[1], [0], [0], [1], [0, 0, 1, 1], [], []>} : vector<16x32xbf16>, vector<32x128xbf16>, vector<16x128xf32> -> vector<16x128xf32>
    %88 = vector.broadcast %77 : vector<1x128xf32> to vector<16x128xf32>
    %89 = arith.addf %87, %88 : vector<16x128xf32>
    %cst_63 = arith.constant 0.000000e+00 : f32
    %90 = vector.broadcast %cst_63 : f32 to vector<16x128xf32>
    %91 = arith.maximumf %89, %90 : vector<16x128xf32>
    %92 = arith.truncf %91 : vector<16x128xf32> to vector<16x128xbf16>
    %93 = arith.truncf %81 : vector<128x128xf32> to vector<128x128xbf16>
    %cst_64 = arith.constant dense<0.000000e+00> : vector<16x128xf32>
    %94 = tpu.matmul %92, %93, %cst_64 {dimension_numbers = #tpu.dot_dimension_numbers<[1], [0], [0], [1], [0, 0, 1, 1], [], []>} : vector<16x128xbf16>, vector<128x128xbf16>, vector<16x128xf32> -> vector<16x128xf32>
    %95 = vector.broadcast %85 : vector<1x128xf32> to vector<16x128xf32>
    %96 = arith.addf %94, %95 : vector<16x128xf32>
    %c2_65 = arith.constant 2 : index
    %c0_66 = arith.constant 0 : index
    %c0_67 = arith.constant 0 : index
    %97 = vector.load %arg14[%c2_65, %c0_66, %c0_67] : memref<4x16x128xf32, #tpu.memory_space<vmem>>, vector<1x16x128xf32>
    %98 = vector.shape_cast %97 : vector<1x16x128xf32> to vector<16x128xf32>
    %99 = vector.shape_cast %96 : vector<16x128xf32> to vector<1x16x128xf32>
    tpu.vector_store %arg14[%c2_65, %c0_66, %c0_67], %99 {strides = array<i32>} : memref<4x16x128xf32, #tpu.memory_space<vmem>>, vector<1x16x128xf32>,
    %c3 = arith.constant 3 : index
    %c0_68 = arith.constant 0 : index
    %c0_69 = arith.constant 0 : index
    %100 = vector.load %arg10[%c3, %c0_68, %c0_69] : memref<4x32x128xf32, #tpu.memory_space<vmem>>, vector<1x32x128xf32>
    %101 = vector.shape_cast %100 : vector<1x32x128xf32> to vector<32x128xf32>
    %102 = arith.mulf %3, %101 : vector<32x128xf32>
    %103 = arith.addf %2, %102 : vector<32x128xf32>
    %c3_70 = arith.constant 3 : index
    %c0_71 = arith.constant 0 : index
    %c0_72 = arith.constant 0 : index
    %104 = vector.load %arg11[%c3_70, %c0_71, %c0_72] : memref<4x1x128xf32, #tpu.memory_space<vmem>>, vector<1x1x128xf32>
    %105 = vector.shape_cast %104 : vector<1x1x128xf32> to vector<1x128xf32>
    %106 = arith.mulf %5, %105 : vector<1x128xf32>
    %107 = arith.addf %4, %106 : vector<1x128xf32>
    %c3_73 = arith.constant 3 : index
    %c0_74 = arith.constant 0 : index
    %c0_75 = arith.constant 0 : index
    %108 = vector.load %arg12[%c3_73, %c0_74, %c0_75] : memref<4x128x128xf32, #tpu.memory_space<vmem>>, vector<1x128x128xf32>
    %109 = vector.shape_cast %108 : vector<1x128x128xf32> to vector<128x128xf32>
    %110 = arith.mulf %7, %109 : vector<128x128xf32>
    %111 = arith.addf %6, %110 : vector<128x128xf32>
    %c3_76 = arith.constant 3 : index
    %c0_77 = arith.constant 0 : index
    %c0_78 = arith.constant 0 : index
    %112 = vector.load %arg13[%c3_76, %c0_77, %c0_78] : memref<4x1x128xf32, #tpu.memory_space<vmem>>, vector<1x1x128xf32>
    %113 = vector.shape_cast %112 : vector<1x1x128xf32> to vector<1x128xf32>
    %114 = arith.mulf %9, %113 : vector<1x128xf32>
    %115 = arith.addf %8, %114 : vector<1x128xf32>
    %116 = arith.truncf %103 : vector<32x128xf32> to vector<32x128xbf16>
    %cst_79 = arith.constant dense<0.000000e+00> : vector<16x128xf32>
    %117 = tpu.matmul %1, %116, %cst_79 {dimension_numbers = #tpu.dot_dimension_numbers<[1], [0], [0], [1], [0, 0, 1, 1], [], []>} : vector<16x32xbf16>, vector<32x128xbf16>, vector<16x128xf32> -> vector<16x128xf32>
    %118 = vector.broadcast %107 : vector<1x128xf32> to vector<16x128xf32>
    %119 = arith.addf %117, %118 : vector<16x128xf32>
    %cst_80 = arith.constant 0.000000e+00 : f32
    %120 = vector.broadcast %cst_80 : f32 to vector<16x128xf32>
    %121 = arith.maximumf %119, %120 : vector<16x128xf32>
    %122 = arith.truncf %121 : vector<16x128xf32> to vector<16x128xbf16>
    %123 = arith.truncf %111 : vector<128x128xf32> to vector<128x128xbf16>
    %cst_81 = arith.constant dense<0.000000e+00> : vector<16x128xf32>
    %124 = tpu.matmul %122, %123, %cst_81 {dimension_numbers = #tpu.dot_dimension_numbers<[1], [0], [0], [1], [0, 0, 1, 1], [], []>} : vector<16x128xbf16>, vector<128x128xbf16>, vector<16x128xf32> -> vector<16x128xf32>
    %125 = vector.broadcast %115 : vector<1x128xf32> to vector<16x128xf32>
    %126 = arith.addf %124, %125 : vector<16x128xf32>
    %c3_82 = arith.constant 3 : index
    %c0_83 = arith.constant 0 : index
    %c0_84 = arith.constant 0 : index
    %127 = vector.load %arg14[%c3_82, %c0_83, %c0_84] : memref<4x16x128xf32, #tpu.memory_space<vmem>>, vector<1x16x128xf32>
    %128 = vector.shape_cast %127 : vector<1x16x128xf32> to vector<16x128xf32>
    %129 = vector.shape_cast %126 : vector<16x128xf32> to vector<1x16x128xf32>
    tpu.vector_store %arg14[%c3_82, %c0_83, %c0_84], %129 {strides = array<i32>} : memref<4x16x128xf32, #tpu.memory_space<vmem>>, vector<1x16x128xf32>,
    return
  }
  func.func @transform_0(%arg0: i32) -> (i32, i32) {
    %c0_i32 = arith.constant 0 : i32
    %c0_i32_0 = arith.constant 0 : i32
    %c0_i32_1 = arith.constant 0 : i32
    return %c0_i32, %c0_i32_0 : i32, i32
  }
  func.func @transform_1(%arg0: i32) -> (i32, i32) {
    %c0_i32 = arith.constant 0 : i32
    %c0_i32_0 = arith.constant 0 : i32
    %c0_i32_1 = arith.constant 0 : i32
    return %c0_i32, %c0_i32_0 : i32, i32
  }
  func.func @transform_2(%arg0: i32) -> (i32, i32) {
    %c0_i32 = arith.constant 0 : i32
    %c0_i32_0 = arith.constant 0 : i32
    %c0_i32_1 = arith.constant 0 : i32
    return %c0_i32, %c0_i32_0 : i32, i32
  }
  func.func @transform_3(%arg0: i32) -> (i32, i32) {
    %c0_i32 = arith.constant 0 : i32
    %c0_i32_0 = arith.constant 0 : i32
    %c0_i32_1 = arith.constant 0 : i32
    return %c0_i32, %c0_i32_0 : i32, i32
  }
  func.func @transform_4(%arg0: i32) -> (i32, i32) {
    %c0_i32 = arith.constant 0 : i32
    %c0_i32_0 = arith.constant 0 : i32
    %c0_i32_1 = arith.constant 0 : i32
    return %c0_i32, %c0_i32_0 : i32, i32
  }
  func.func @transform_5(%arg0: i32) -> (i32, i32) {
    %c0_i32 = arith.constant 0 : i32
    %c0_i32_0 = arith.constant 0 : i32
    %c0_i32_1 = arith.constant 0 : i32
    return %c0_i32, %c0_i32_0 : i32, i32
  }
  func.func @transform_6(%arg0: i32) -> (i32, i32) {
    %c0_i32 = arith.constant 0 : i32
    %c0_i32_0 = arith.constant 0 : i32
    %c0_i32_1 = arith.constant 0 : i32
    return %c0_i32, %c0_i32_0 : i32, i32
  }
  func.func @transform_7(%arg0: i32) -> (i32, i32) {
    %c0_i32 = arith.constant 0 : i32
    %c0_i32_0 = arith.constant 0 : i32
    %c0_i32_1 = arith.constant 0 : i32
    return %c0_i32, %c0_i32_0 : i32, i32
  }
  func.func @transform_8(%arg0: i32) -> (i32, i32) {
    %c0_i32 = arith.constant 0 : i32
    %c0_i32_0 = arith.constant 0 : i32
    %c0_i32_1 = arith.constant 0 : i32
    return %c0_i32, %c0_i32_0 : i32, i32
  }
  func.func @transform_9(%arg0: i32) -> (i32, i32, i32) {
    %c0_i32 = arith.constant 0 : i32
    %c0_i32_0 = arith.constant 0 : i32
    %c0_i32_1 = arith.constant 0 : i32
    return %arg0, %c0_i32, %c0_i32_0 : i32, i32, i32
  }
  func.func @transform_10(%arg0: i32) -> (i32, i32, i32) {
    %c0_i32 = arith.constant 0 : i32
    %c0_i32_0 = arith.constant 0 : i32
    %c0_i32_1 = arith.constant 0 : i32
    return %arg0, %c0_i32, %c0_i32_0 : i32, i32, i32
  }
  func.func @transform_11(%arg0: i32) -> (i32, i32, i32) {
    %c0_i32 = arith.constant 0 : i32
    %c0_i32_0 = arith.constant 0 : i32
    %c0_i32_1 = arith.constant 0 : i32
    return %arg0, %c0_i32, %c0_i32_0 : i32, i32, i32
  }
  func.func @transform_12(%arg0: i32) -> (i32, i32, i32) {
    %c0_i32 = arith.constant 0 : i32
    %c0_i32_0 = arith.constant 0 : i32
    %c0_i32_1 = arith.constant 0 : i32
    return %arg0, %c0_i32, %c0_i32_0 : i32, i32, i32
  }
  func.func @transform_13(%arg0: i32) -> (i32, i32, i32) {
    %c0_i32 = arith.constant 0 : i32
    %c0_i32_0 = arith.constant 0 : i32
    %c0_i32_1 = arith.constant 0 : i32
    return %arg0, %c0_i32, %c0_i32_0 : i32, i32, i32
  }
}

</mosaic_0001>

<llo_original>
// kernel: bnn_thompson_forward.1
$region0: #{bnn_thompson_forward.1}
  #allocation0 [shape = 'u32[]', space=smem, size = 0x4, offset = 0x4, fixed_abs, tag = 'smem constant byte address 0x4 - core index']
  #allocation1 [shape = 'u32[72,128]{1,0:T(1,128)}', space=vmem, size = 0x9000, scoped, tag = 'internal scratch']
  %s0 = inlined_call_operand.vmem [shape: f32[16,32], index: 0, kind: input, shape index: {}]
  %s1 = inlined_call_operand.vmem [shape: f32[32,128], index: 1, kind: input, shape index: {}]
  %s2 = inlined_call_operand.vmem [shape: f32[32,128], index: 2, kind: input, shape index: {}]
  %s3 = inlined_call_operand.vmem [shape: f32[1,128], index: 3, kind: input, shape index: {}]
  %s4 = inlined_call_operand.vmem [shape: f32[1,128], index: 4, kind: input, shape index: {}]
  %s5 = inlined_call_operand.hbm [shape: f32[128,128], index: 5, kind: input, shape index: {}]
  %s6 = inlined_call_operand.vmem [shape: f32[128,128], index: 6, kind: input, shape index: {}]
  %s7 = inlined_call_operand.vmem [shape: f32[1,128], index: 7, kind: input, shape index: {}]
  %s8 = inlined_call_operand.vmem [shape: f32[1,128], index: 8, kind: input, shape index: {}]
  %s9 = inlined_call_operand.vmem [shape: f32[8,32,128], index: 9, kind: input, shape index: {}]
  %s10 = inlined_call_operand.vmem [shape: f32[8,1,128], index: 10, kind: input, shape index: {}]
  %s11 = inlined_call_operand.hbm [shape: f32[8,128,128], index: 11, kind: input, shape index: {}]
  %s12 = inlined_call_operand.vmem [shape: f32[8,1,128], index: 12, kind: input, shape index: {}]
  %s13 = inlined_call_operand.vmem [shape: f32[8,16,128], index: 13, kind: output, shape index: {}]
  %s14 = sld [smem:[#allocation0]]
  $region93: #{bnn_thompson_forward.1} parent=0
    _
  %s16 = ssub.s32 1, %s14
  %s17 = scalar_select 0, %s16, %s14
  $region1: #{bnn_thompson_forward.1} parent=0
    #allocation2 [shape = 'u8[65536]{0}', space=vmem, size = 0x10000, scoped, tag = 'input window, operand 5, single buffered']
    #allocation3 [shape = 's32[2]{0}', space=sflag, size = 0x8, scoped, tag = 'scoped memory for bnn_thompson_forward.1']
    #allocation4 [shape = 'u8[524288]{0}', space=vmem, size = 0x80000, scoped, tag = 'input window, operand 11']
    #allocation5 [shape = 's32[2]{0}', space=sflag, size = 0x8, scoped, tag = 'scoped memory for bnn_thompson_forward.1']
    %18 = vsyncpa [#allocation3], 0
    %19 = vsyncpa [#allocation5], 0
    %s20 = scalar_lea.sflag [#allocation5], 1
    %21 = vsyncpa %s20, 0
    loop: start=0, step=1, limit=4
    $region2: #{bnn_thompson_forward.1} parent=1 // loop_pre_header
      _
    $region3: #{bnn_thompson_forward.1} parent=1 // loop_header
      %s23 = sphi 0, %s27
      %p24 = scmp.ge.s32.totalorder %s23, 4
      %s31 = sphi 0, %s31
      %s33 = sphi 0, %s31
      %s34 = sphi 0, %s33
      %s48 = sphi 0, %s34
      %s52 = sphi 0, %s52
      %s54 = sphi 0, %s52
      %s55 = sphi 0, %s54
      %s69 = sphi 0, %s55
      %s73 = sphi 0, %s73
      %s75 = sphi 0, %s73
      %s76 = sphi 0, %s75
      %s90 = sphi 0, %s76
      %s94 = sphi 0, %s94
      %s96 = sphi 0, %s94
      %s97 = sphi 0, %s96
      %s111 = sphi 0, %s97
      %s115 = sphi 0, %s115
      %s117 = sphi 0, %s115
      %s118 = sphi 0, %s117
      %s132 = sphi 0, %s118
      %s136 = sphi 0, %s136
      %s138 = sphi 0, %s136
      %s139 = sphi 0, %s138
      %s153 = sphi 0, %s139
      %s157 = sphi 0, %s157
      %s159 = sphi 0, %s157
      %s160 = sphi 0, %s159
      %s174 = sphi 0, %s160
      %s178 = sphi 0, %s178
      %s180 = sphi 0, %s178
      %s181 = sphi 0, %s180
      %s195 = sphi 0, %s181
      %s199 = sphi 0, %s199
      %s201 = sphi 0, %s199
      %s202 = sphi 0, %s201
      %s216 = sphi 0, %s202
      %s222 = sphi 0, %s224
      %s225 = sphi 0, %s222
      %s226 = sphi 0, %s225
      %s242 = sphi 0, %s226
      %s248 = sphi 0, %s250
      %s251 = sphi 0, %s248
      %s252 = sphi 0, %s251
      %s268 = sphi 0, %s252
      %s274 = sphi 0, %s276
      %s277 = sphi 0, %s274
      %s278 = sphi 0, %s277
      %s294 = sphi 0, %s278
      %s300 = sphi 0, %s302
      %s303 = sphi 0, %s300
      %s304 = sphi 0, %s303
      %s320 = sphi 0, %s304
      %s326 = sphi 0, %s328
      %s329 = sphi 0, %s326
      %s330 = sphi 0, %s329
      %s346 = sphi 0, %s330
    $region4: #{bnn_thompson_forward.1} parent=1 // loop_header_branch
      %26 = sbr.rel (%p24) target = $region8
    $region5: #{bnn_thompson_forward.1} parent=1 // loop_body
      %s28 = ssub.s32 %s23, 1
      %s29 = ssub.s32 %s23, 2
      %s30 = sadd.s32 %s23, 1
      %s32 = sadd.s32 %s31, 1
      %p35 = scmp.eq.s32.totalorder %s23, 1
      %p36 = scmp.ne.s32.totalorder %s31, %s33
      %p37 = scmp.eq.s32.totalorder %s23, 0
      %p38 = por %p36, %p37
      %p39 = scmp.ne.s32.totalorder %s31, %s33
      %p40 = scmp.eq.s32.totalorder %s28, 1
      %p41 = por %p39, %p40
      %p42 = scmp.ne.s32.totalorder %s33, %s34
      %p43 = scmp.eq.s32.totalorder %s28, 0
      %p44 = por %p42, %p43
      %p45 = scmp.ne.s32.totalorder %s33, %s34
      %p46 = scmp.eq.s32.totalorder %s29, 1
      %p47 = por %p45, %p46
      %p49 = scmp.ne.s32.totalorder %s34, %s48
      %p50 = scmp.eq.s32.totalorder %s29, 0
      %p51 = por %p49, %p50
      %s53 = sadd.s32 %s52, 1
      %p56 = scmp.eq.s32.totalorder %s23, 1
      %p57 = scmp.ne.s32.totalorder %s52, %s54
      %p58 = scmp.eq.s32.totalorder %s23, 0
      %p59 = por %p57, %p58
      %p60 = scmp.ne.s32.totalorder %s52, %s54
      %p61 = scmp.eq.s32.totalorder %s28, 1
      %p62 = por %p60, %p61
      %p63 = scmp.ne.s32.totalorder %s54, %s55
      %p64 = scmp.eq.s32.totalorder %s28, 0
      %p65 = por %p63, %p64
      %p66 = scmp.ne.s32.totalorder %s54, %s55
      %p67 = scmp.eq.s32.totalorder %s29, 1
      %p68 = por %p66, %p67
      %p70 = scmp.ne.s32.totalorder %s55, %s69
      %p71 = scmp.eq.s32.totalorder %s29, 0
      %p72 = por %p70, %p71
      %s74 = sadd.s32 %s73, 1
      %p77 = scmp.eq.s32.totalorder %s23, 1
      %p78 = scmp.ne.s32.totalorder %s73, %s75
      %p79 = scmp.eq.s32.totalorder %s23, 0
      %p80 = por %p78, %p79
      %p81 = scmp.ne.s32.totalorder %s73, %s75
      %p82 = scmp.eq.s32.totalorder %s28, 1
      %p83 = por %p81, %p82
      %p84 = scmp.ne.s32.totalorder %s75, %s76
      %p85 = scmp.eq.s32.totalorder %s28, 0
      %p86 = por %p84, %p85
      %p87 = scmp.ne.s32.totalorder %s75, %s76
      %p88 = scmp.eq.s32.totalorder %s29, 1
      %p89 = por %p87, %p88
      %p91 = scmp.ne.s32.totalorder %s76, %s90
      %p92 = scmp.eq.s32.totalorder %s29, 0
      %p93 = por %p91, %p92
      %s95 = sadd.s32 %s94, 1
      %p98 = scmp.eq.s32.totalorder %s23, 1
      %p99 = scmp.ne.s32.totalorder %s94, %s96
      %p100 = scmp.eq.s32.totalorder %s23, 0
      %p101 = por %p99, %p100
      %p102 = scmp.ne.s32.totalorder %s94, %s96
      %p103 = scmp.eq.s32.totalorder %s28, 1
      %p104 = por %p102, %p103
      %p105 = scmp.ne.s32.totalorder %s96, %s97
      %p106 = scmp.eq.s32.totalorder %s28, 0
      %p107 = por %p105, %p106
      %p108 = scmp.ne.s32.totalorder %s96, %s97
      %p109 = scmp.eq.s32.totalorder %s29, 1
      %p110 = por %p108, %p109
      %p112 = scmp.ne.s32.totalorder %s97, %s111
      %p113 = scmp.eq.s32.totalorder %s29, 0
      %p114 = por %p112, %p113
      %s116 = sadd.s32 %s115, 1
      %p119 = scmp.eq.s32.totalorder %s23, 1
      %p120 = scmp.ne.s32.totalorder %s115, %s117
      %p121 = scmp.eq.s32.totalorder %s23, 0
      %p122 = por %p120, %p121
      %p123 = scmp.ne.s32.totalorder %s115, %s117
      %p124 = scmp.eq.s32.totalorder %s28, 1
      %p125 = por %p123, %p124
      %p126 = scmp.ne.s32.totalorder %s117, %s118
      %p127 = scmp.eq.s32.totalorder %s28, 0
      %p128 = por %p126, %p127
      %p129 = scmp.ne.s32.totalorder %s117, %s118
      %p130 = scmp.eq.s32.totalorder %s29, 1
      %p131 = por %p129, %p130
      %p133 = scmp.ne.s32.totalorder %s118, %s132
      %p134 = scmp.eq.s32.totalorder %s29, 0
      %p135 = por %p133, %p134
      %s137 = sadd.s32 %s136, 1
      %p140 = scmp.eq.s32.totalorder %s23, 1
      %p141 = scmp.ne.s32.totalorder %s136, %s138
      %p142 = scmp.eq.s32.totalorder %s23, 0
      %p143 = por %p141, %p142
      %p144 = scmp.ne.s32.totalorder %s136, %s138
      %p145 = scmp.eq.s32.totalorder %s28, 1
      %p146 = por %p144, %p145
      %p147 = scmp.ne.s32.totalorder %s138, %s139
      %p148 = scmp.eq.s32.totalorder %s28, 0
      %p149 = por %p147, %p148
      %p150 = scmp.ne.s32.totalorder %s138, %s139
      %p151 = scmp.eq.s32.totalorder %s29, 1
      %p152 = por %p150, %p151
      %p154 = scmp.ne.s32.totalorder %s139, %s153
      %p155 = scmp.eq.s32.totalorder %s29, 0
      %p156 = por %p154, %p155
      %s158 = sadd.s32 %s157, 1
      %p161 = scmp.eq.s32.totalorder %s23, 1
      %p162 = scmp.ne.s32.totalorder %s157, %s159
      %p163 = scmp.eq.s32.totalorder %s23, 0
      %p164 = por %p162, %p163
      %p165 = scmp.ne.s32.totalorder %s157, %s159
      %p166 = scmp.eq.s32.totalorder %s28, 1
      %p167 = por %p165, %p166
      %p168 = scmp.ne.s32.totalorder %s159, %s160
      %p169 = scmp.eq.s32.totalorder %s28, 0
      %p170 = por %p168, %p169
      %p171 = scmp.ne.s32.totalorder %s159, %s160
      %p172 = scmp.eq.s32.totalorder %s29, 1
      %p173 = por %p171, %p172
      %p175 = scmp.ne.s32.totalorder %s160, %s174
      %p176 = scmp.eq.s32.totalorder %s29, 0
      %p177 = por %p175, %p176
      %s179 = sadd.s32 %s178, 1
      %p182 = scmp.eq.s32.totalorder %s23, 1
      %p183 = scmp.ne.s32.totalorder %s178, %s180
      %p184 = scmp.eq.s32.totalorder %s23, 0
      %p185 = por %p183, %p184
      %p186 = scmp.ne.s32.totalorder %s178, %s180
      %p187 = scmp.eq.s32.totalorder %s28, 1
      %p188 = por %p186, %p187
      %p189 = scmp.ne.s32.totalorder %s180, %s181
      %p190 = scmp.eq.s32.totalorder %s28, 0
      %p191 = por %p189, %p190
      %p192 = scmp.ne.s32.totalorder %s180, %s181
      %p193 = scmp.eq.s32.totalorder %s29, 1
      %p194 = por %p192, %p193
      %p196 = scmp.ne.s32.totalorder %s181, %s195
      %p197 = scmp.eq.s32.totalorder %s29, 0
      %p198 = por %p196, %p197
      %s200 = sadd.s32 %s199, 1
      %p203 = scmp.eq.s32.totalorder %s23, 1
      %p204 = scmp.ne.s32.totalorder %s199, %s201
      %p205 = scmp.eq.s32.totalorder %s23, 0
      %p206 = por %p204, %p205
      %p207 = scmp.ne.s32.totalorder %s199, %s201
      %p208 = scmp.eq.s32.totalorder %s28, 1
      %p209 = por %p207, %p208
      %p210 = scmp.ne.s32.totalorder %s201, %s202
      %p211 = scmp.eq.s32.totalorder %s28, 0
      %p212 = por %p210, %p211
      %p213 = scmp.ne.s32.totalorder %s201, %s202
      %p214 = scmp.eq.s32.totalorder %s29, 1
      %p215 = por %p213, %p214
      %p217 = scmp.ne.s32.totalorder %s202, %s216
      %p218 = scmp.eq.s32.totalorder %s29, 0
      %p219 = por %p217, %p218
      %s220 = ssub.s32 %s23, %s30
      %p221 = scmp.eq.s32.totalorder %s220, 0
      %s223 = sadd.s32 %s222, 1
      %s224 = scalar_select %p221, %s222, %s223
      %p227 = pneg %p221
      %p228 = scmp.eq.s32.totalorder %s23, 1
      %p229 = por %p227, %p228
      %p230 = scmp.ne.s32.totalorder %s222, %s225
      %p231 = scmp.eq.s32.totalorder %s23, 0
      %p232 = por %p230, %p231
      %p233 = scmp.ne.s32.totalorder %s222, %s225
      %p234 = scmp.eq.s32.totalorder %s28, 1
      %p235 = por %p233, %p234
      %p236 = scmp.ne.s32.totalorder %s225, %s226
      %p237 = scmp.eq.s32.totalorder %s28, 0
      %p238 = por %p236, %p237
      %p239 = scmp.ne.s32.totalorder %s225, %s226
      %p240 = scmp.eq.s32.totalorder %s29, 1
      %p241 = por %p239, %p240
      %p243 = scmp.ne.s32.totalorder %s226, %s242
      %p244 = scmp.eq.s32.totalorder %s29, 0
      %p245 = por %p243, %p244
      %s246 = ssub.s32 %s23, %s30
      %p247 = scmp.eq.s32.totalorder %s246, 0
      %s249 = sadd.s32 %s248, 1
      %s250 = scalar_select %p247, %s248, %s249
      %p253 = pneg %p247
      %p254 = scmp.eq.s32.totalorder %s23, 1
      %p255 = por %p253, %p254
      %p256 = scmp.ne.s32.totalorder %s248, %s251
      %p257 = scmp.eq.s32.totalorder %s23, 0
      %p258 = por %p256, %p257
      %p259 = scmp.ne.s32.totalorder %s248, %s251
      %p260 = scmp.eq.s32.totalorder %s28, 1
      %p261 = por %p259, %p260
      %p262 = scmp.ne.s32.totalorder %s251, %s252
      %p263 = scmp.eq.s32.totalorder %s28, 0
      %p264 = por %p262, %p263
      %p265 = scmp.ne.s32.totalorder %s251, %s252
      %p266 = scmp.eq.s32.totalorder %s29, 1
      %p267 = por %p265, %p266
      %p269 = scmp.ne.s32.totalorder %s252, %s268
      %p270 = scmp.eq.s32.totalorder %s29, 0
      %p271 = por %p269, %p270
      %s272 = ssub.s32 %s23, %s30
      %p273 = scmp.eq.s32.totalorder %s272, 0
      %s275 = sadd.s32 %s274, 1
      %s276 = scalar_select %p273, %s274, %s275
      %p279 = pneg %p273
      %p280 = scmp.eq.s32.totalorder %s23, 1
      %p281 = por %p279, %p280
      %p282 = scmp.ne.s32.totalorder %s274, %s277
      %p283 = scmp.eq.s32.totalorder %s23, 0
      %p284 = por %p282, %p283
      %p285 = scmp.ne.s32.totalorder %s274, %s277
      %p286 = scmp.eq.s32.totalorder %s28, 1
      %p287 = por %p285, %p286
      %p288 = scmp.ne.s32.totalorder %s277, %s278
      %p289 = scmp.eq.s32.totalorder %s28, 0
      %p290 = por %p288, %p289
      %p291 = scmp.ne.s32.totalorder %s277, %s278
      %p292 = scmp.eq.s32.totalorder %s29, 1
      %p293 = por %p291, %p292
      %p295 = scmp.ne.s32.totalorder %s278, %s294
      %p296 = scmp.eq.s32.totalorder %s29, 0
      %p297 = por %p295, %p296
      %s298 = ssub.s32 %s23, %s30
      %p299 = scmp.eq.s32.totalorder %s298, 0
      %s301 = sadd.s32 %s300, 1
      %s302 = scalar_select %p299, %s300, %s301
      %p305 = pneg %p299
      %p306 = scmp.eq.s32.totalorder %s23, 1
      %p307 = por %p305, %p306
      %p308 = scmp.ne.s32.totalorder %s300, %s303
      %p309 = scmp.eq.s32.totalorder %s23, 0
      %p310 = por %p308, %p309
      %p311 = scmp.ne.s32.totalorder %s300, %s303
      %p312 = scmp.eq.s32.totalorder %s28, 1
      %p313 = por %p311, %p312
      %p314 = scmp.ne.s32.totalorder %s303, %s304
      %p315 = scmp.eq.s32.totalorder %s28, 0
      %p316 = por %p314, %p315
      %p317 = scmp.ne.s32.totalorder %s303, %s304
      %p318 = scmp.eq.s32.totalorder %s29, 1
      %p319 = por %p317, %p318
      %p321 = scmp.ne.s32.totalorder %s304, %s320
      %p322 = scmp.eq.s32.totalorder %s29, 0
      %p323 = por %p321, %p322
      %s324 = ssub.s32 %s23, %s30
      %p325 = scmp.eq.s32.totalorder %s324, 0
      %s327 = sadd.s32 %s326, 1
      %s328 = scalar_select %p325, %s326, %s327
      %p331 = pneg %p325
      %p332 = scmp.eq.s32.totalorder %s23, 1
      %p333 = por %p331, %p332
      %p334 = scmp.ne.s32.totalorder %s326, %s329
      %p335 = scmp.eq.s32.totalorder %s23, 0
      %p336 = por %p334, %p335
      %p337 = scmp.ne.s32.totalorder %s326, %s329
      %p338 = scmp.eq.s32.totalorder %s28, 1
      %p339 = por %p337, %p338
      %p340 = scmp.ne.s32.totalorder %s329, %s330
      %p341 = scmp.eq.s32.totalorder %s28, 0
      %p342 = por %p340, %p341
      %p343 = scmp.ne.s32.totalorder %s329, %s330
      %p344 = scmp.eq.s32.totalorder %s29, 1
      %p345 = por %p343, %p344
      %p347 = scmp.ne.s32.totalorder %s330, %s346
      %p348 = scmp.eq.s32.totalorder %s29, 0
      %p349 = por %p347, %p348
      %p350 = scmp.le.s32.totalorder 1, %s23
      %p351 = scmp.lt.s32.totalorder %s23, 3
      %p352 = pnand %p350, %p351
      %p353 = pneg %p352
      // Predicated region
      $region9: #{bnn_thompson_forward.1} parent=5 // pred_check
        _
      $region10: #{bnn_thompson_forward.1} parent=5 // pred_check_branch
        %355 = sbr.rel (%p352) target = $region12
      $region11: #{bnn_thompson_forward.1} parent=5 // pred_region
        %s356 = ssub.s32 %s23, 1
        // Predicated region
        $region13: #{bnn_thompson_forward.1} parent=11 // pred_check
          %p357 = pneg %p44
        $region14: #{bnn_thompson_forward.1} parent=11 // pred_check_branch
          %359 = sbr.rel (%p357) target = $region16
        $region15: #{bnn_thompson_forward.1} parent=11 // pred_region
          _
        $region16: #{bnn_thompson_forward.1} parent=11 // pred_fallthru
          _
        // Predicated region
        $region17: #{bnn_thompson_forward.1} parent=11 // pred_check
          %p360 = pneg %p65
        $region18: #{bnn_thompson_forward.1} parent=11 // pred_check_branch
          %362 = sbr.rel (%p360) target = $region20
        $region19: #{bnn_thompson_forward.1} parent=11 // pred_region
          _
        $region20: #{bnn_thompson_forward.1} parent=11 // pred_fallthru
          _
        // Predicated region
        $region21: #{bnn_thompson_forward.1} parent=11 // pred_check
          %p363 = pneg %p86
        $region22: #{bnn_thompson_forward.1} parent=11 // pred_check_branch
          %365 = sbr.rel (%p363) target = $region24
        $region23: #{bnn_thompson_forward.1} parent=11 // pred_region
          _
        $region24: #{bnn_thompson_forward.1} parent=11 // pred_fallthru
          _
        // Predicated region
        $region25: #{bnn_thompson_forward.1} parent=11 // pred_check
          %p366 = pneg %p107
        $region26: #{bnn_thompson_forward.1} parent=11 // pred_check_branch
          %368 = sbr.rel (%p366) target = $region28
        $region27: #{bnn_thompson_forward.1} parent=11 // pred_region
          _
        $region28: #{bnn_thompson_forward.1} parent=11 // pred_fallthru
          _
        // Predicated region
        $region29: #{bnn_thompson_forward.1} parent=11 // pred_check
          %p369 = pneg %p128
        $region30: #{bnn_thompson_forward.1} parent=11 // pred_check_branch
          %371 = sbr.rel (%p369) target = $region32
        $region31: #{bnn_thompson_forward.1} parent=11 // pred_region
          _
        $region32: #{bnn_thompson_forward.1} parent=11 // pred_fallthru
          _
        // Predicated region
        $region33: #{bnn_thompson_forward.1} parent=11 // pred_check
          %p372 = pneg %p149
        $region34: #{bnn_thompson_forward.1} parent=11 // pred_check_branch
          %374 = sbr.rel (%p372) target = $region36
        $region35: #{bnn_thompson_forward.1} parent=11 // pred_region
          %376 = vsyncadd [#allocation3], 0
          %s377 = sshll.u32 %s5, 4
          %s378 = int_to_ptr.hbm [resolvable:$true] %s377
          %s379 = sshll.u32 [#allocation2], 4
          %s380 = int_to_ptr.vmem [resolvable:$true] %s379
          %385 = dma.hbm_to_vmem [thread:$0]  %s378, 2048, %s380, [#allocation3], 128, 128, 8
        $region36: #{bnn_thompson_forward.1} parent=11 // pred_fallthru
          _
        // Predicated region
        $region37: #{bnn_thompson_forward.1} parent=11 // pred_check
          %p386 = pneg %p170
        $region38: #{bnn_thompson_forward.1} parent=11 // pred_check_branch
          %388 = sbr.rel (%p386) target = $region40
        $region39: #{bnn_thompson_forward.1} parent=11 // pred_region
          _
        $region40: #{bnn_thompson_forward.1} parent=11 // pred_fallthru
          _
        // Predicated region
        $region41: #{bnn_thompson_forward.1} parent=11 // pred_check
          %p389 = pneg %p191
        $region42: #{bnn_thompson_forward.1} parent=11 // pred_check_branch
          %391 = sbr.rel (%p389) target = $region44
        $region43: #{bnn_thompson_forward.1} parent=11 // pred_region
          _
        $region44: #{bnn_thompson_forward.1} parent=11 // pred_fallthru
          _
        // Predicated region
        $region45: #{bnn_thompson_forward.1} parent=11 // pred_check
          %p392 = pneg %p212
        $region46: #{bnn_thompson_forward.1} parent=11 // pred_check_branch
          %394 = sbr.rel (%p392) target = $region48
        $region47: #{bnn_thompson_forward.1} parent=11 // pred_region
          _
        $region48: #{bnn_thompson_forward.1} parent=11 // pred_fallthru
          _
      $region12: #{bnn_thompson_forward.1} parent=5 // pred_fallthru
        _
      %p395 = scmp.lt.s32.totalorder %s23, 2
      // Predicated region
      $region49: #{bnn_thompson_forward.1} parent=5 // pred_check
        %p396 = pneg %p395
      $region50: #{bnn_thompson_forward.1} parent=5 // pred_check_branch
        %398 = sbr.rel (%p396) target = $region52
      $region51: #{bnn_thompson_forward.1} parent=5 // pred_region
        // Predicated region
        $region53: #{bnn_thompson_forward.1} parent=51 // pred_check
          %p399 = pneg %p232
        $region54: #{bnn_thompson_forward.1} parent=51 // pred_check_branch
          %401 = sbr.rel (%p399) target = $region56
        $region55: #{bnn_thompson_forward.1} parent=51 // pred_region
          %s402 = smul.u32 4, %s23
          %p403 = scmp.lt.s32.totalorder %s402, 7
          %s404 = scalar_select %p403, %s402, 7
          %s405 = smul.addr %s404, 4
          %s406 = smul.addr %s405, 8
          %s407 = scalar_lea.vmem %s9, %s406
          %s408 = smul.u32 4, %s23
        $region56: #{bnn_thompson_forward.1} parent=51 // pred_fallthru
          _
        // Predicated region
        $region57: #{bnn_thompson_forward.1} parent=51 // pred_check
          %p409 = pneg %p258
        $region58: #{bnn_thompson_forward.1} parent=51 // pred_check_branch
          %411 = sbr.rel (%p409) target = $region60
        $region59: #{bnn_thompson_forward.1} parent=51 // pred_region
          %s412 = smul.u32 4, %s23
          %p413 = scmp.lt.s32.totalorder %s412, 7
          %s414 = scalar_select %p413, %s412, 7
          %s415 = scalar_lea.vmem %s10, %s414
          %s416 = smul.u32 4, %s23
        $region60: #{bnn_thompson_forward.1} parent=51 // pred_fallthru
          _
        // Predicated region
        $region61: #{bnn_thompson_forward.1} parent=51 // pred_check
          %p417 = pneg %p284
        $region62: #{bnn_thompson_forward.1} parent=51 // pred_check_branch
          %419 = sbr.rel (%p417) target = $region64
        $region63: #{bnn_thompson_forward.1} parent=51 // pred_region
          %s420 = sand.u32 %s274, 1
          %s421 = scalar_lea.sflag [#allocation5], %s420
          %s422 = sand.u32 %s274, 1
          %s423 = smul.addr %s422, 512
          %s424 = scalar_lea.vmem [#allocation4], %s423
          %s425 = smul.u32 4, %s23
          %427 = vsyncadd %s421, 0
          %s428 = smul.addr %s425, 16
          %s429 = smul.addr %s428, 8
          %s430 = scalar_lea.hbm %s11, %s429
          %s431 = sshll.u32 %s430, 4
          %s432 = int_to_ptr.hbm [resolvable:$true] %s431
          %s433 = sshll.u32 %s424, 4
          %s434 = int_to_ptr.vmem [resolvable:$true] %s433
          %439 = dma.hbm_to_vmem [thread:$0]  %s432, 8192, %s434, %s421, 128, 128, 8
        $region64: #{bnn_thompson_forward.1} parent=51 // pred_fallthru
          _
        // Predicated region
        $region65: #{bnn_thompson_forward.1} parent=51 // pred_check
          %p440 = pneg %p310
        $region66: #{bnn_thompson_forward.1} parent=51 // pred_check_branch
          %442 = sbr.rel (%p440) target = $region68
        $region67: #{bnn_thompson_forward.1} parent=51 // pred_region
          %s443 = smul.u32 4, %s23
          %p444 = scmp.lt.s32.totalorder %s443, 7
          %s445 = scalar_select %p444, %s443, 7
          %s446 = scalar_lea.vmem %s12, %s445
          %s447 = smul.u32 4, %s23
        $region68: #{bnn_thompson_forward.1} parent=51 // pred_fallthru
          _
      $region52: #{bnn_thompson_forward.1} parent=5 // pred_fallthru
        _
      %p448 = scmp.le.s32.totalorder 1, %s23
      %p449 = scmp.lt.s32.totalorder %s23, 3
      %p450 = pnand %p448, %p449
      %p451 = pneg %p450
      // Predicated region
      $region69: #{bnn_thompson_forward.1} parent=5 // pred_check
        _
      $region70: #{bnn_thompson_forward.1} parent=5 // pred_check_branch
        %453 = sbr.rel (%p450) target = $region72
      $region71: #{bnn_thompson_forward.1} parent=5 // pred_region
        %s454 = ssub.s32 %s23, 1
        // Predicated region
        $region73: #{bnn_thompson_forward.1} parent=71 // pred_check
          %p455 = pneg %p149
        $region74: #{bnn_thompson_forward.1} parent=71 // pred_check_branch
          %457 = sbr.rel (%p455) target = $region76
        $region75: #{bnn_thompson_forward.1} parent=71 // pred_region
          %459 = dma.done [#allocation3], 2048
        $region76: #{bnn_thompson_forward.1} parent=71 // pred_fallthru
          _
        %s460 = sand.u32 %s277, 1
        %s461 = scalar_lea.sflag [#allocation5], %s460
        %s462 = sand.u32 %s277, 1
        %s463 = smul.addr %s462, 512
        %s464 = scalar_lea.vmem [#allocation4], %s463
        // Predicated region
        $region77: #{bnn_thompson_forward.1} parent=71 // pred_check
          %p465 = pneg %p290
        $region78: #{bnn_thompson_forward.1} parent=71 // pred_check_branch
          %467 = sbr.rel (%p465) target = $region80
        $region79: #{bnn_thompson_forward.1} parent=71 // pred_region
          %469 = dma.done %s461, 8192
        $region80: #{bnn_thompson_forward.1} parent=71 // pred_fallthru
          _
        %p470 = pneg %p44
        %p471 = pneg %p41
        %p472 = pneg %p65
        %p473 = pneg %p62
        %p474 = pneg %p86
        %p475 = pneg %p83
        %p476 = pneg %p107
        %p477 = pneg %p104
        %p478 = pneg %p128
        %p479 = pneg %p125
        %p480 = pneg %p149
        %p481 = pneg %p146
        %p482 = pneg %p170
        %p483 = pneg %p167
        %p484 = pneg %p191
        %p485 = pneg %p188
        %p486 = pneg %p212
        %p487 = pneg %p209
        %s488 = smul.u32 4, %s28
        %p489 = scmp.lt.s32.totalorder %s488, 7
        %s490 = scalar_select %p489, %s488, 7
        %s491 = smul.addr %s490, 4
        %s492 = smul.addr %s491, 8
        %s493 = scalar_lea.vmem %s9, %s492
        %p494 = pneg %p238
        %p495 = pneg %p235
        %s496 = smul.u32 4, %s28
        %p497 = scmp.lt.s32.totalorder %s496, 7
        %s498 = scalar_select %p497, %s496, 7
        %s499 = scalar_lea.vmem %s10, %s498
        %p500 = pneg %p264
        %p501 = pneg %p261
        %s502 = sand.u32 %s277, 1
        %s503 = scalar_lea.sflag [#allocation5], %s502
        %s504 = sand.u32 %s277, 1
        %s505 = smul.addr %s504, 512
        %s506 = scalar_lea.vmem [#allocation4], %s505
        %p507 = pneg %p290
        %p508 = pneg %p287
        %s509 = smul.u32 4, %s28
        %p510 = scmp.lt.s32.totalorder %s509, 7
        %s511 = scalar_select %p510, %s509, 7
        %s512 = scalar_lea.vmem %s12, %s511
        %p513 = pneg %p316
        %p514 = pneg %p313
        %p515 = pneg %p342
        %p516 = pneg %p339
        %s517 = smul.u32 4, %s28
        %p518 = scmp.lt.s32.totalorder %s517, 7
        %s519 = scalar_select %p518, %s517, 7
        %s520 = smul.addr %s519, 2
        %s521 = smul.addr %s520, 8
        %s522 = scalar_lea.vmem %s13, %s521
        %s523 = smul.u32 4, %s28
        %p524 = scmp.lt.s32.totalorder %s523, 7
        %s525 = scalar_select %p524, %s523, 7
        %s526 = smul.addr %s525, 4
        %s527 = smul.addr %s526, 8
        %s528 = scalar_lea.vmem %s9, %s527
        %s529 = smul.u32 4, %s28
        %s530 = smul.u32 4, %s28
        %p531 = scmp.lt.s32.totalorder %s530, 7
        %s532 = scalar_select %p531, %s530, 7
        %s533 = scalar_lea.vmem %s10, %s532
        %s534 = smul.u32 4, %s28
        %s535 = smul.u32 4, %s28
        %s536 = smul.u32 4, %s28
        %p537 = scmp.lt.s32.totalorder %s536, 7
        %s538 = scalar_select %p537, %s536, 7
        %s539 = scalar_lea.vmem %s12, %s538
        %s540 = smul.u32 4, %s28
        %s541 = smul.u32 4, %s28
        %p542 = scmp.lt.s32.totalorder %s541, 7
        %s543 = scalar_select %p542, %s541, 7
        %s544 = smul.addr %s543, 2
        %s545 = smul.addr %s544, 8
        %s546 = scalar_lea.vmem %s13, %s545
        %s547 = smul.u32 4, %s28
        %v549 = vld [vmem:[%s0] sm:$0xff]
        %v550 = vld [vmem:[%s0 + $0x8] sm:$0xff]
        %v551 = vpack.c.bf16 %v550, %v549
        %v552 = vld [vmem:[%s1] sm:$0xff]
        %v553 = vld [vmem:[%s1 + $0x8] sm:$0xff]
        %v554 = vld [vmem:[%s1 + $0x10] sm:$0xff]
        %v555 = vld [vmem:[%s1 + $0x18] sm:$0xff]
        %v556 = vld [vmem:[%s2] sm:$0xff]
        %v557 = vld [vmem:[%s2 + $0x8] sm:$0xff]
        %v558 = vld [vmem:[%s2 + $0x10] sm:$0xff]
        %v559 = vld [vmem:[%s2 + $0x18] sm:$0xff]
        %v560 = vld [vmem:[%s3] sm:$0x1]
        %v561 = vld [vmem:[%s4] sm:$0x1]
        %v562 = vld [vmem:[#allocation2] sm:$0xff]
        %v563 = vld [vmem:[#allocation2 + $0x8] sm:$0xff]
        %v564 = vld [vmem:[#allocation2 + $0x10] sm:$0xff]
        %v565 = vld [vmem:[#allocation2 + $0x18] sm:$0xff]
        %v566 = vld [vmem:[#allocation2 + $0x20] sm:$0xff]
        %v567 = vld [vmem:[#allocation2 + $0x28] sm:$0xff]
        %v568 = vld [vmem:[#allocation2 + $0x30] sm:$0xff]
        %v569 = vld [vmem:[#allocation2 + $0x38] sm:$0xff]
        %v570 = vld [vmem:[#allocation2 + $0x40] sm:$0xff]
        %v571 = vld [vmem:[#allocation2 + $0x48] sm:$0xff]
        %v572 = vld [vmem:[#allocation2 + $0x50] sm:$0xff]
        %v573 = vld [vmem:[#allocation2 + $0x58] sm:$0xff]
        %v574 = vld [vmem:[#allocation2 + $0x60] sm:$0xff]
        %v575 = vld [vmem:[#allocation2 + $0x68] sm:$0xff]
        %v576 = vld [vmem:[#allocation2 + $0x70] sm:$0xff]
        %v577 = vld [vmem:[#allocation2 + $0x78] sm:$0xff]
        %v578 = vld [vmem:[%s6] sm:$0xff]
        %v579 = vld [vmem:[%s6 + $0x8] sm:$0xff]
        %v580 = vld [vmem:[%s6 + $0x10] sm:$0xff]
        %v581 = vld [vmem:[%s6 + $0x18] sm:$0xff]
        %v582 = vld [vmem:[%s6 + $0x20] sm:$0xff]
        %v583 = vld [vmem:[%s6 + $0x28] sm:$0xff]
        %v584 = vld [vmem:[%s6 + $0x30] sm:$0xff]
        %v585 = vld [vmem:[%s6 + $0x38] sm:$0xff]
        %v586 = vld [vmem:[%s6 + $0x40] sm:$0xff]
        %v587 = vld [vmem:[%s6 + $0x48] sm:$0xff]
        %v588 = vld [vmem:[%s6 + $0x50] sm:$0xff]
        %v589 = vld [vmem:[%s6 + $0x58] sm:$0xff]
        %v590 = vld [vmem:[%s6 + $0x60] sm:$0xff]
        %v591 = vld [vmem:[%s6 + $0x68] sm:$0xff]
        %v592 = vld [vmem:[%s6 + $0x70] sm:$0xff]
        %v593 = vld [vmem:[%s6 + $0x78] sm:$0xff]
        %v594 = vld [vmem:[%s7] sm:$0x1]
        %v595 = vld [vmem:[%s8] sm:$0x1]
        %v596 = vld [vmem:[%s528] sm:$0xff]
        %v597 = vld [vmem:[%s528 + $0x8] sm:$0xff]
        %v598 = vld [vmem:[%s528 + $0x10] sm:$0xff]
        %v599 = vld [vmem:[%s528 + $0x18] sm:$0xff]
        %v600 = vmul.f32 %v556, %v596
        %v601 = vmul.f32 %v557, %v597
        %v602 = vmul.f32 %v558, %v598
        %v603 = vmul.f32 %v559, %v599
        %v604 = vadd.f32 %v552, %v600
        %v605 = vadd.f32 %v553, %v601
        %v606 = vadd.f32 %v554, %v602
        %v607 = vadd.f32 %v555, %v603
        %v608 = vld [vmem:[%s533] sm:$0x1]
        %v609 = vmul.f32 %v561, %v608
        %v610 = vadd.f32 %v560, %v609
        %v611 = vld [vmem:[%s464] sm:$0xff]
        %v612 = vld [vmem:[%s464 + $0x8] sm:$0xff]
        %v613 = vld [vmem:[%s464 + $0x10] sm:$0xff]
        %v614 = vld [vmem:[%s464 + $0x18] sm:$0xff]
        %v615 = vld [vmem:[%s464 + $0x20] sm:$0xff]
        %v616 = vld [vmem:[%s464 + $0x28] sm:$0xff]
        %v617 = vld [vmem:[%s464 + $0x30] sm:$0xff]
        %v618 = vld [vmem:[%s464 + $0x38] sm:$0xff]
        %v619 = vld [vmem:[%s464 + $0x40] sm:$0xff]
        %v620 = vld [vmem:[%s464 + $0x48] sm:$0xff]
        %v621 = vld [vmem:[%s464 + $0x50] sm:$0xff]
        %v622 = vld [vmem:[%s464 + $0x58] sm:$0xff]
        %v623 = vld [vmem:[%s464 + $0x60] sm:$0xff]
        %v624 = vld [vmem:[%s464 + $0x68] sm:$0xff]
        %v625 = vld [vmem:[%s464 + $0x70] sm:$0xff]
        %v626 = vld [vmem:[%s464 + $0x78] sm:$0xff]
        %v627 = vmul.f32 %v578, %v611
        %v628 = vmul.f32 %v579, %v612
        %v629 = vmul.f32 %v580, %v613
        %v630 = vmul.f32 %v581, %v614
        %v631 = vmul.f32 %v582, %v615
        %v632 = vmul.f32 %v583, %v616
        %v633 = vmul.f32 %v584, %v617
        %v634 = vmul.f32 %v585, %v618
        %v635 = vmul.f32 %v586, %v619
        %v636 = vmul.f32 %v587, %v620
        %v637 = vmul.f32 %v588, %v621
        %v638 = vmul.f32 %v589, %v622
        %v639 = vmul.f32 %v590, %v623
        %v640 = vmul.f32 %v591, %v624
        %v641 = vmul.f32 %v592, %v625
        %v642 = vmul.f32 %v593, %v626
        %v643 = vadd.f32 %v562, %v627
        %v644 = vadd.f32 %v563, %v628
        %v645 = vadd.f32 %v564, %v629
        %v646 = vadd.f32 %v565, %v630
        %v647 = vadd.f32 %v566, %v631
        %v648 = vadd.f32 %v567, %v632
        %v649 = vadd.f32 %v568, %v633
        %v650 = vadd.f32 %v569, %v634
        %v651 = vadd.f32 %v570, %v635
        %v652 = vadd.f32 %v571, %v636
        %v653 = vadd.f32 %v572, %v637
        %v654 = vadd.f32 %v573, %v638
        %v655 = vadd.f32 %v574, %v639
        %v656 = vadd.f32 %v575, %v640
        %v657 = vadd.f32 %v576, %v641
        %v658 = vadd.f32 %v577, %v642
        %v659 = vld [vmem:[%s539] sm:$0x1]
        %v660 = vmul.f32 %v595, %v659
        %v661 = vadd.f32 %v594, %v660
        %v662 = vpack.c.bf16 %v605, %v604
        %v663 = vpack.c.bf16 %v607, %v606
        %v665 = vperm.slane %v610, 0
        %vm667 = vcmask 261120
        %v669 = vsel %vm667, %v551, 0
        %671 = vmatpush.bf16.msra.mxu0 0
        %672 = vmatpush.bf16.msra.mxu0 0
        %673 = vmatpush.bf16.msra.mxu0 0
        %674 = vmatpush.bf16.msra.mxu0 0
        %675 = vmatpush.bf16.msra.mxu0 0
        %676 = vmatpush.bf16.msra.mxu0 0
        %677 = vmatpush.bf16.msra.mxu0 %v663
        %678 = vmatpush.bf16.msra.mxu0 %v662
        %679 = vmatmul.bf16.gmra.mxu0 %v669
        %v680 = vpop.f32.mrf.mxu0
        %v681 = vadd.f32 %v665, %v680
        %v682 = vpop.f32.mrf.mxu0
        %v683 = vadd.f32 %v665, %v682
        %684 = vdwg.mxu0
        %v685 = vmax.f32 %v681, 0.0
        %v686 = vmax.f32 %v683, 0.0
        %v687 = vpack.c.bf16 %v686, %v685
        %v688 = vpack.c.bf16 %v644, %v643
        %v689 = vpack.c.bf16 %v646, %v645
        %v690 = vpack.c.bf16 %v648, %v647
        %v691 = vpack.c.bf16 %v650, %v649
        %v692 = vpack.c.bf16 %v652, %v651
        %v693 = vpack.c.bf16 %v654, %v653
        %v694 = vpack.c.bf16 %v656, %v655
        %v695 = vpack.c.bf16 %v658, %v657
        %v697 = vperm.slane %v661, 0
        %699 = vmatpush.bf16.msra.mxu0 %v695
        %700 = vmatpush.bf16.msra.mxu0 %v694
        %701 = vmatpush.bf16.msra.mxu0 %v693
        %702 = vmatpush.bf16.msra.mxu0 %v692
        %703 = vmatpush.bf16.msra.mxu0 %v691
        %704 = vmatpush.bf16.msra.mxu0 %v690
        %705 = vmatpush.bf16.msra.mxu0 %v689
        %706 = vmatpush.bf16.msra.mxu0 %v688
        %707 = vmatmul.bf16.gmra.mxu0 %v687
        %v708 = vpop.f32.mrf.mxu0
        %v709 = vadd.f32 %v697, %v708
        %v710 = vpop.f32.mrf.mxu0
        %v711 = vadd.f32 %v697, %v710
        %712 = vdwg.mxu0
        %713 = vst [vmem:[%s546] sm:$0xff] %v709
        %714 = vst [vmem:[%s546 + $0x8] sm:$0xff] %v711
        %s715 = scalar_lea.vmem %s528, 32
        %v716 = vld [vmem:[%s715] sm:$0xff]
        %v717 = vld [vmem:[%s715 + $0x8] sm:$0xff]
        %v718 = vld [vmem:[%s715 + $0x10] sm:$0xff]
        %v719 = vld [vmem:[%s715 + $0x18] sm:$0xff]
        %v720 = vmul.f32 %v556, %v716
        %v721 = vmul.f32 %v557, %v717
        %v722 = vmul.f32 %v558, %v718
        %v723 = vmul.f32 %v559, %v719
        %v724 = vadd.f32 %v552, %v720
        %v725 = vadd.f32 %v553, %v721
        %v726 = vadd.f32 %v554, %v722
        %v727 = vadd.f32 %v555, %v723
        %s728 = scalar_lea.vmem %s533, 1
        %v729 = vld [vmem:[%s728] sm:$0x1]
        %v730 = vmul.f32 %v561, %v729
        %v731 = vadd.f32 %v560, %v730
        %s732 = scalar_lea.vmem %s464, 128 [#allocation4]
        %v733 = vld [vmem:[%s732] sm:$0xff]
        %v734 = vld [vmem:[%s732 + $0x8] sm:$0xff]
        %v735 = vld [vmem:[%s732 + $0x10] sm:$0xff]
        %v736 = vld [vmem:[%s732 + $0x18] sm:$0xff]
        %v737 = vld [vmem:[%s732 + $0x20] sm:$0xff]
        %v738 = vld [vmem:[%s732 + $0x28] sm:$0xff]
        %v739 = vld [vmem:[%s732 + $0x30] sm:$0xff]
        %v740 = vld [vmem:[%s732 + $0x38] sm:$0xff]
        %v741 = vld [vmem:[%s732 + $0x40] sm:$0xff]
        %v742 = vld [vmem:[%s732 + $0x48] sm:$0xff]
        %v743 = vld [vmem:[%s732 + $0x50] sm:$0xff]
        %v744 = vld [vmem:[%s732 + $0x58] sm:$0xff]
        %v745 = vld [vmem:[%s732 + $0x60] sm:$0xff]
        %v746 = vld [vmem:[%s732 + $0x68] sm:$0xff]
        %v747 = vld [vmem:[%s732 + $0x70] sm:$0xff]
        %v748 = vld [vmem:[%s732 + $0x78] sm:$0xff]
        %v749 = vmul.f32 %v578, %v733
        %v750 = vmul.f32 %v579, %v734
        %v751 = vmul.f32 %v580, %v735
        %v752 = vmul.f32 %v581, %v736
        %v753 = vmul.f32 %v582, %v737
        %v754 = vmul.f32 %v583, %v738
        %v755 = vmul.f32 %v584, %v739
        %v756 = vmul.f32 %v585, %v740
        %v757 = vmul.f32 %v586, %v741
        %v758 = vmul.f32 %v587, %v742
        %v759 = vmul.f32 %v588, %v743
        %v760 = vmul.f32 %v589, %v744
        %v761 = vmul.f32 %v590, %v745
        %v762 = vmul.f32 %v591, %v746
        %v763 = vmul.f32 %v592, %v747
        %v764 = vmul.f32 %v593, %v748
        %v765 = vadd.f32 %v562, %v749
        %v766 = vadd.f32 %v563, %v750
        %v767 = vadd.f32 %v564, %v751
        %v768 = vadd.f32 %v565, %v752
        %v769 = vadd.f32 %v566, %v753
        %v770 = vadd.f32 %v567, %v754
        %v771 = vadd.f32 %v568, %v755
        %v772 = vadd.f32 %v569, %v756
        %v773 = vadd.f32 %v570, %v757
        %v774 = vadd.f32 %v571, %v758
        %v775 = vadd.f32 %v572, %v759
        %v776 = vadd.f32 %v573, %v760
        %v777 = vadd.f32 %v574, %v761
        %v778 = vadd.f32 %v575, %v762
        %v779 = vadd.f32 %v576, %v763
        %v780 = vadd.f32 %v577, %v764
        %s781 = scalar_lea.vmem %s539, 1
        %v782 = vld [vmem:[%s781] sm:$0x1]
        %v783 = vmul.f32 %v595, %v782
        %v784 = vadd.f32 %v594, %v783
        %v785 = vpack.c.bf16 %v725, %v724
        %v786 = vpack.c.bf16 %v727, %v726
        %v788 = vperm.slane %v731, 0
        %790 = vmatpush.bf16.msra.mxu0 0
        %791 = vmatpush.bf16.msra.mxu0 0
        %792 = vmatpush.bf16.msra.mxu0 0
        %793 = vmatpush.bf16.msra.mxu0 0
        %794 = vmatpush.bf16.msra.mxu0 0
        %795 = vmatpush.bf16.msra.mxu0 0
        %796 = vmatpush.bf16.msra.mxu0 %v786
        %797 = vmatpush.bf16.msra.mxu0 %v785
        %798 = vmatmul.bf16.gmra.mxu0 %v669
        %v799 = vpop.f32.mrf.mxu0
        %v800 = vadd.f32 %v788, %v799
        %v801 = vpop.f32.mrf.mxu0
        %v802 = vadd.f32 %v788, %v801
        %803 = vdwg.mxu0
        %v804 = vmax.f32 %v800, 0.0
        %v805 = vmax.f32 %v802, 0.0
        %v806 = vpack.c.bf16 %v805, %v804
        %v807 = vpack.c.bf16 %v766, %v765
        %v808 = vpack.c.bf16 %v768, %v767
        %v809 = vpack.c.bf16 %v770, %v769
        %v810 = vpack.c.bf16 %v772, %v771
        %v811 = vpack.c.bf16 %v774, %v773
        %v812 = vpack.c.bf16 %v776, %v775
        %v813 = vpack.c.bf16 %v778, %v777
        %v814 = vpack.c.bf16 %v780, %v779
        %v816 = vperm.slane %v784, 0
        %818 = vmatpush.bf16.msra.mxu0 %v814
        %819 = vmatpush.bf16.msra.mxu0 %v813
        %820 = vmatpush.bf16.msra.mxu0 %v812
        %821 = vmatpush.bf16.msra.mxu0 %v811
        %822 = vmatpush.bf16.msra.mxu0 %v810
        %823 = vmatpush.bf16.msra.mxu0 %v809
        %824 = vmatpush.bf16.msra.mxu0 %v808
        %825 = vmatpush.bf16.msra.mxu0 %v807
        %826 = vmatmul.bf16.gmra.mxu0 %v806
        %v827 = vpop.f32.mrf.mxu0
        %v828 = vadd.f32 %v816, %v827
        %v829 = vpop.f32.mrf.mxu0
        %v830 = vadd.f32 %v816, %v829
        %831 = vdwg.mxu0
        %s832 = scalar_lea.vmem %s546, 16
        %833 = vst [vmem:[%s832] sm:$0xff] %v828
        %834 = vst [vmem:[%s832 + $0x8] sm:$0xff] %v830
        %s835 = scalar_lea.vmem %s528, 64
        %v836 = vld [vmem:[%s835] sm:$0xff]
        %v837 = vld [vmem:[%s835 + $0x8] sm:$0xff]
        %v838 = vld [vmem:[%s835 + $0x10] sm:$0xff]
        %v839 = vld [vmem:[%s835 + $0x18] sm:$0xff]
        %v840 = vmul.f32 %v556, %v836
        %v841 = vmul.f32 %v557, %v837
        %v842 = vmul.f32 %v558, %v838
        %v843 = vmul.f32 %v559, %v839
        %v844 = vadd.f32 %v552, %v840
        %v845 = vadd.f32 %v553, %v841
        %v846 = vadd.f32 %v554, %v842
        %v847 = vadd.f32 %v555, %v843
        %s848 = scalar_lea.vmem %s533, 2
        %v849 = vld [vmem:[%s848] sm:$0x1]
        %v850 = vmul.f32 %v561, %v849
        %v851 = vadd.f32 %v560, %v850
        %s852 = scalar_lea.vmem %s464, 256 [#allocation4]
        %v853 = vld [vmem:[%s852] sm:$0xff]
        %v854 = vld [vmem:[%s852 + $0x8] sm:$0xff]
        %v855 = vld [vmem:[%s852 + $0x10] sm:$0xff]
        %v856 = vld [vmem:[%s852 + $0x18] sm:$0xff]
        %v857 = vld [vmem:[%s852 + $0x20] sm:$0xff]
        %v858 = vld [vmem:[%s852 + $0x28] sm:$0xff]
        %v859 = vld [vmem:[%s852 + $0x30] sm:$0xff]
        %v860 = vld [vmem:[%s852 + $0x38] sm:$0xff]
        %v861 = vld [vmem:[%s852 + $0x40] sm:$0xff]
        %v862 = vld [vmem:[%s852 + $0x48] sm:$0xff]
        %v863 = vld [vmem:[%s852 + $0x50] sm:$0xff]
        %v864 = vld [vmem:[%s852 + $0x58] sm:$0xff]
        %v865 = vld [vmem:[%s852 + $0x60] sm:$0xff]
        %v866 = vld [vmem:[%s852 + $0x68] sm:$0xff]
        %v867 = vld [vmem:[%s852 + $0x70] sm:$0xff]
        %v868 = vld [vmem:[%s852 + $0x78] sm:$0xff]
        %v869 = vmul.f32 %v578, %v853
        %v870 = vmul.f32 %v579, %v854
        %v871 = vmul.f32 %v580, %v855
        %v872 = vmul.f32 %v581, %v856
        %v873 = vmul.f32 %v582, %v857
        %v874 = vmul.f32 %v583, %v858
        %v875 = vmul.f32 %v584, %v859
        %v876 = vmul.f32 %v585, %v860
        %v877 = vmul.f32 %v586, %v861
        %v878 = vmul.f32 %v587, %v862
        %v879 = vmul.f32 %v588, %v863
        %v880 = vmul.f32 %v589, %v864
        %v881 = vmul.f32 %v590, %v865
        %v882 = vmul.f32 %v591, %v866
        %v883 = vmul.f32 %v592, %v867
        %v884 = vmul.f32 %v593, %v868
        %v885 = vadd.f32 %v562, %v869
        %v886 = vadd.f32 %v563, %v870
        %v887 = vadd.f32 %v564, %v871
        %v888 = vadd.f32 %v565, %v872
        %v889 = vadd.f32 %v566, %v873
        %v890 = vadd.f32 %v567, %v874
        %v891 = vadd.f32 %v568, %v875
        %v892 = vadd.f32 %v569, %v876
        %v893 = vadd.f32 %v570, %v877
        %v894 = vadd.f32 %v571, %v878
        %v895 = vadd.f32 %v572, %v879
        %v896 = vadd.f32 %v573, %v880
        %v897 = vadd.f32 %v574, %v881
        %v898 = vadd.f32 %v575, %v882
        %v899 = vadd.f32 %v576, %v883
        %v900 = vadd.f32 %v577, %v884
        %s901 = scalar_lea.vmem %s539, 2
        %v902 = vld [vmem:[%s901] sm:$0x1]
        %v903 = vmul.f32 %v595, %v902
        %v904 = vadd.f32 %v594, %v903
        %v905 = vpack.c.bf16 %v845, %v844
        %v906 = vpack.c.bf16 %v847, %v846
        %v908 = vperm.slane %v851, 0
        %910 = vmatpush.bf16.msra.mxu0 0
        %911 = vmatpush.bf16.msra.mxu0 0
        %912 = vmatpush.bf16.msra.mxu0 0
        %913 = vmatpush.bf16.msra.mxu0 0
        %914 = vmatpush.bf16.msra.mxu0 0
        %915 = vmatpush.bf16.msra.mxu0 0
        %916 = vmatpush.bf16.msra.mxu0 %v906
        %917 = vmatpush.bf16.msra.mxu0 %v905
        %918 = vmatmul.bf16.gmra.mxu0 %v669
        %v919 = vpop.f32.mrf.mxu0
        %v920 = vadd.f32 %v908, %v919
        %v921 = vpop.f32.mrf.mxu0
        %v922 = vadd.f32 %v908, %v921
        %923 = vdwg.mxu0
        %v924 = vmax.f32 %v920, 0.0
        %v925 = vmax.f32 %v922, 0.0
        %v926 = vpack.c.bf16 %v925, %v924
        %v927 = vpack.c.bf16 %v886, %v885
        %v928 = vpack.c.bf16 %v888, %v887
        %v929 = vpack.c.bf16 %v890, %v889
        %v930 = vpack.c.bf16 %v892, %v891
        %v931 = vpack.c.bf16 %v894, %v893
        %v932 = vpack.c.bf16 %v896, %v895
        %v933 = vpack.c.bf16 %v898, %v897
        %v934 = vpack.c.bf16 %v900, %v899
        %v936 = vperm.slane %v904, 0
        %938 = vmatpush.bf16.msra.mxu0 %v934
        %939 = vmatpush.bf16.msra.mxu0 %v933
        %940 = vmatpush.bf16.msra.mxu0 %v932
        %941 = vmatpush.bf16.msra.mxu0 %v931
        %942 = vmatpush.bf16.msra.mxu0 %v930
        %943 = vmatpush.bf16.msra.mxu0 %v929
        %944 = vmatpush.bf16.msra.mxu0 %v928
        %945 = vmatpush.bf16.msra.mxu0 %v927
        %946 = vmatmul.bf16.gmra.mxu0 %v926
        %v947 = vpop.f32.mrf.mxu0
        %v948 = vadd.f32 %v936, %v947
        %v949 = vpop.f32.mrf.mxu0
        %v950 = vadd.f32 %v936, %v949
        %951 = vdwg.mxu0
        %s952 = scalar_lea.vmem %s546, 32
        %953 = vst [vmem:[%s952] sm:$0xff] %v948
        %954 = vst [vmem:[%s952 + $0x8] sm:$0xff] %v950
        %s955 = scalar_lea.vmem %s528, 96
        %v956 = vld [vmem:[%s955] sm:$0xff]
        %v957 = vld [vmem:[%s955 + $0x8] sm:$0xff]
        %v958 = vld [vmem:[%s955 + $0x10] sm:$0xff]
        %v959 = vld [vmem:[%s955 + $0x18] sm:$0xff]
        %v960 = vmul.f32 %v556, %v956
        %v961 = vmul.f32 %v557, %v957
        %v962 = vmul.f32 %v558, %v958
        %v963 = vmul.f32 %v559, %v959
        %v964 = vadd.f32 %v552, %v960
        %v965 = vadd.f32 %v553, %v961
        %v966 = vadd.f32 %v554, %v962
        %v967 = vadd.f32 %v555, %v963
        %s968 = scalar_lea.vmem %s533, 3
        %v969 = vld [vmem:[%s968] sm:$0x1]
        %v970 = vmul.f32 %v561, %v969
        %v971 = vadd.f32 %v560, %v970
        %s972 = scalar_lea.vmem %s464, 384 [#allocation4]
        %v973 = vld [vmem:[%s972] sm:$0xff]
        %v974 = vld [vmem:[%s972 + $0x8] sm:$0xff]
        %v975 = vld [vmem:[%s972 + $0x10] sm:$0xff]
        %v976 = vld [vmem:[%s972 + $0x18] sm:$0xff]
        %v977 = vld [vmem:[%s972 + $0x20] sm:$0xff]
        %v978 = vld [vmem:[%s972 + $0x28] sm:$0xff]
        %v979 = vld [vmem:[%s972 + $0x30] sm:$0xff]
        %v980 = vld [vmem:[%s972 + $0x38] sm:$0xff]
        %v981 = vld [vmem:[%s972 + $0x40] sm:$0xff]
        %v982 = vld [vmem:[%s972 + $0x48] sm:$0xff]
        %v983 = vld [vmem:[%s972 + $0x50] sm:$0xff]
        %v984 = vld [vmem:[%s972 + $0x58] sm:$0xff]
        %v985 = vld [vmem:[%s972 + $0x60] sm:$0xff]
        %v986 = vld [vmem:[%s972 + $0x68] sm:$0xff]
        %v987 = vld [vmem:[%s972 + $0x70] sm:$0xff]
        %v988 = vld [vmem:[%s972 + $0x78] sm:$0xff]
        %v989 = vmul.f32 %v578, %v973
        %v990 = vmul.f32 %v579, %v974
        %v991 = vmul.f32 %v580, %v975
        %v992 = vmul.f32 %v581, %v976
        %v993 = vmul.f32 %v582, %v977
        %v994 = vmul.f32 %v583, %v978
        %v995 = vmul.f32 %v584, %v979
        %v996 = vmul.f32 %v585, %v980
        %v997 = vmul.f32 %v586, %v981
        %v998 = vmul.f32 %v587, %v982
        %v999 = vmul.f32 %v588, %v983
        %v1000 = vmul.f32 %v589, %v984
        %v1001 = vmul.f32 %v590, %v985
        %v1002 = vmul.f32 %v591, %v986
        %v1003 = vmul.f32 %v592, %v987
        %v1004 = vmul.f32 %v593, %v988
        %v1005 = vadd.f32 %v562, %v989
        %v1006 = vadd.f32 %v563, %v990
        %v1007 = vadd.f32 %v564, %v991
        %v1008 = vadd.f32 %v565, %v992
        %v1009 = vadd.f32 %v566, %v993
        %v1010 = vadd.f32 %v567, %v994
        %v1011 = vadd.f32 %v568, %v995
        %v1012 = vadd.f32 %v569, %v996
        %v1013 = vadd.f32 %v570, %v997
        %v1014 = vadd.f32 %v571, %v998
        %v1015 = vadd.f32 %v572, %v999
        %v1016 = vadd.f32 %v573, %v1000
        %v1017 = vadd.f32 %v574, %v1001
        %v1018 = vadd.f32 %v575, %v1002
        %v1019 = vadd.f32 %v576, %v1003
        %v1020 = vadd.f32 %v577, %v1004
        %s1021 = scalar_lea.vmem %s539, 3
        %v1022 = vld [vmem:[%s1021] sm:$0x1]
        %v1023 = vmul.f32 %v595, %v1022
        %v1024 = vadd.f32 %v594, %v1023
        %v1025 = vpack.c.bf16 %v965, %v964
        %v1026 = vpack.c.bf16 %v967, %v966
        %v1028 = vperm.slane %v971, 0
        %1030 = vmatpush.bf16.msra.mxu0 0
        %1031 = vmatpush.bf16.msra.mxu0 0
        %1032 = vmatpush.bf16.msra.mxu0 0
        %1033 = vmatpush.bf16.msra.mxu0 0
        %1034 = vmatpush.bf16.msra.mxu0 0
        %1035 = vmatpush.bf16.msra.mxu0 0
        %1036 = vmatpush.bf16.msra.mxu0 %v1026
        %1037 = vmatpush.bf16.msra.mxu0 %v1025
        %1038 = vmatmul.bf16.gmra.mxu0 %v669
        %v1039 = vpop.f32.mrf.mxu0
        %v1040 = vadd.f32 %v1028, %v1039
        %v1041 = vpop.f32.mrf.mxu0
        %v1042 = vadd.f32 %v1028, %v1041
        %1043 = vdwg.mxu0
        %v1044 = vmax.f32 %v1040, 0.0
        %v1045 = vmax.f32 %v1042, 0.0
        %v1046 = vpack.c.bf16 %v1045, %v1044
        %v1047 = vpack.c.bf16 %v1006, %v1005
        %v1048 = vpack.c.bf16 %v1008, %v1007
        %v1049 = vpack.c.bf16 %v1010, %v1009
        %v1050 = vpack.c.bf16 %v1012, %v1011
        %v1051 = vpack.c.bf16 %v1014, %v1013
        %v1052 = vpack.c.bf16 %v1016, %v1015
        %v1053 = vpack.c.bf16 %v1018, %v1017
        %v1054 = vpack.c.bf16 %v1020, %v1019
        %v1056 = vperm.slane %v1024, 0
        %1058 = vmatpush.bf16.msra.mxu0 %v1054
        %1059 = vmatpush.bf16.msra.mxu0 %v1053
        %1060 = vmatpush.bf16.msra.mxu0 %v1052
        %1061 = vmatpush.bf16.msra.mxu0 %v1051
        %1062 = vmatpush.bf16.msra.mxu0 %v1050
        %1063 = vmatpush.bf16.msra.mxu0 %v1049
        %1064 = vmatpush.bf16.msra.mxu0 %v1048
        %1065 = vmatpush.bf16.msra.mxu0 %v1047
        %1066 = vmatmul.bf16.gmra.mxu0 %v1046
        %v1067 = vpop.f32.mrf.mxu0
        %v1068 = vadd.f32 %v1056, %v1067
        %v1069 = vpop.f32.mrf.mxu0
        %v1070 = vadd.f32 %v1056, %v1069
        %1071 = vdwg.mxu0
        %s1072 = scalar_lea.vmem %s546, 48
        %1073 = vst [vmem:[%s1072] sm:$0xff] %v1068
        %1074 = vst [vmem:[%s1072 + $0x8] sm:$0xff] %v1070
        %s1075 = smul.u32 4, %s28
        %p1076 = scmp.lt.s32.totalorder %s1075, 7
        %s1077 = scalar_select %p1076, %s1075, 7
        %s1078 = smul.addr %s1077, 2
        %s1079 = smul.addr %s1078, 8
        %s1080 = scalar_lea.vmem %s13, %s1079
        // Predicated region
        $region81: #{bnn_thompson_forward.1} parent=71 // pred_check
          %p1081 = pneg %p339
        $region82: #{bnn_thompson_forward.1} parent=71 // pred_check_branch
          %1083 = sbr.rel (%p1081) target = $region84
        $region83: #{bnn_thompson_forward.1} parent=71 // pred_region
          %s1084 = smul.u32 4, %s28
        $region84: #{bnn_thompson_forward.1} parent=71 // pred_fallthru
          _
      $region72: #{bnn_thompson_forward.1} parent=5 // pred_fallthru
        _
      %p1085 = scmp.le.s32.totalorder 2, %s23
      // Predicated region
      $region85: #{bnn_thompson_forward.1} parent=5 // pred_check
        %p1086 = pneg %p1085
      $region86: #{bnn_thompson_forward.1} parent=5 // pred_check_branch
        %1088 = sbr.rel (%p1086) target = $region88
      $region87: #{bnn_thompson_forward.1} parent=5 // pred_region
        %s1089 = ssub.s32 %s23, 2
        // Predicated region
        $region89: #{bnn_thompson_forward.1} parent=87 // pred_check
          %p1090 = pneg %p345
        $region90: #{bnn_thompson_forward.1} parent=87 // pred_check_branch
          %1092 = sbr.rel (%p1090) target = $region92
        $region91: #{bnn_thompson_forward.1} parent=87 // pred_region
          %s1093 = smul.u32 4, %s29
          %p1094 = scmp.lt.s32.totalorder %s1093, 7
          %s1095 = scalar_select %p1094, %s1093, 7
          %s1096 = smul.addr %s1095, 2
          %s1097 = smul.addr %s1096, 8
          %s1098 = scalar_lea.vmem %s13, %s1097
        $region92: #{bnn_thompson_forward.1} parent=87 // pred_fallthru
          _
      $region88: #{bnn_thompson_forward.1} parent=5 // pred_fallthru
        _
    $region6: #{bnn_thompson_forward.1} parent=1 // loop_footer
      %s27 = sadd.s32 1, %s23
    $region7: #{bnn_thompson_forward.1} parent=1 // loop_footer_branch
      %22 = sbr.rel target = $region3
    $region8: #{bnn_thompson_forward.1} parent=1 // loop_exit
      _
    %1099 = vsyncpa [#allocation3], 1
    %s1100 = scalar_lea.sflag [#allocation3], 1
    %1101 = vsyncpa %s1100, 1
    %1102 = vsyncpa [#allocation5], 1
    %s1103 = scalar_lea.sflag [#allocation5], 1
    %1104 = vsyncpa %s1103, 1

</llo_original>
